<compile_context>
chip_gen: v7x
topology: tpu7x:2x2x1
jax: 0.10.0
libtpu: 0.0.40
codegen_flags: <defaults>
</compile_context>

<pallas_src>
import functools
import math

import jax
import jax.numpy as jnp
from jax.experimental import pallas as pl
from jax.experimental.pallas import tpu as pltpu


# ------------------------------ shared math ----------------------------------


def _layernorm(x, g, b, eps=1e-5):
    mu = jnp.mean(x, axis=-1, keepdims=True)
    var = jnp.mean((x - mu) ** 2, axis=-1, keepdims=True)
    return (x - mu) * jax.lax.rsqrt(var + eps) * g + b


def _default_vmem_limit_bytes():
    """~3/4 of physical VMEM, capped at 100 MiB (safe on v5e/v6e/v7x)."""
    try:
        cap = int(pltpu.get_tpu_info().vmem_capacity_bytes)
    except Exception:
        cap = 64 * 1024 * 1024          # conservative fallback (v7x-sized)
    return min((cap * 3) // 4, 100 * 1024 * 1024)


# -------------------------------- kernel -------------------------------------


def encoder_stack_kernel(
    x_ref,                 # (Bb, S, E)       input activations (read at l == 0)
    wqkv_ref,              # (1, E, 3E)  bf16 (Q columns pre-scaled by 1/sqrt(hd))
    wo_ref,                # (1, E, E)   bf16
    w1_ref,                # (1, E, dff) bf16
    w2_ref,                # (1, dff, E) bf16
    vec_ref,               # (1, 8, Dmax) f32: [bqkv, bo, b1, b2, g1, be1, g2, be2]
    ng_ref, nb_ref,        # (1, E) f32       final-norm params
    o_ref,                 # (Bb, S, E)       output; resident activation buffer
    ctx_ref,               # VMEM scratch (Bb*S, E) f32: per-head context slabs
    *, nhead, head_dim, dff, ff_chunk, has_final_norm,
):
    l = pl.program_id(1)
    Bb, S, E = x_ref.shape
    N = Bb * S
    cdt = wqkv_ref.dtype                       # matmul-operand dtype (bf16)

    # The output block's index_map is constant along the layer axis, so o_ref
    # stays resident in VMEM across layers and doubles as the activation buffer.
    @pl.when(l == 0)
    def _():
        o_ref[...] = x_ref[...]

    x2d = o_ref[...].astype(jnp.float32).reshape(N, E)

    # ---- per-layer vectors (single packed slab, all f32, kept 2-D) ----
    bqkv = vec_ref[0, 0:1, :3 * E]
    bo = vec_ref[0, 1:2, :E]
    b1 = vec_ref[0, 2:3, :dff]
    b2 = vec_ref[0, 3:4, :E]
    g1 = vec_ref[0, 4:5, :E]
    be1 = vec_ref[0, 5:6, :E]
    g2 = vec_ref[0, 6:7, :E]
    be2 = vec_ref[0, 7:8, :E]

    # ---- fused QKV projection (Q scale folded into the weights) ----
    qkv = jnp.dot(x2d.astype(cdt), wqkv_ref[0],
                  preferred_element_type=jnp.float32) + bqkv
    q = qkv[:, :E].reshape(Bb, S, E)
    k = qkv[:, E:2 * E].reshape(Bb, S, E)
    v = qkv[:, 2 * E:].reshape(Bb, S, E)

    # ---- multi-head attention: each head writes its context into a column
    #      slab of ctx_ref, so head temporaries die after the store.
    for h in range(nhead):
        sl = slice(h * head_dim, (h + 1) * head_dim)
        qh = q[:, :, sl].astype(cdt)
        kh = k[:, :, sl].astype(cdt)
        vh = v[:, :, sl].astype(cdt)
        logits = jnp.einsum("bqd,bkd->bqk", qh, kh,
                            preferred_element_type=jnp.float32)     # (Bb, S, S)
        m = jnp.max(logits, axis=-1, keepdims=True)
        p = jnp.exp(logits - m)
        inv = pl.reciprocal(jnp.sum(p, axis=-1, keepdims=True), approx=True)
        attn = (p * inv).astype(cdt)
        ctxh = jnp.einsum("bqk,bkd->bqd", attn, vh,
                          preferred_element_type=jnp.float32)       # (Bb, S, hd)
        ctx_ref[:, sl] = ctxh.reshape(N, head_dim)

    # ---- single K=E out-projection over all heads at once ----
    sa = jnp.dot(ctx_ref[...].astype(cdt), wo_ref[0],
                 preferred_element_type=jnp.float32) + bo

    # ---- residual + LayerNorm 1 ----
    h1 = _layernorm(x2d + sa, g1, be1)

    # ---- FFN (Linear -> ReLU -> Linear), tiled over dff chunks ----
    h1c = h1.astype(cdt)
    ff = None
    for start in range(0, dff, ff_chunk):
        stop = min(start + ff_chunk, dff)
        a = jnp.dot(h1c, w1_ref[0, :, start:stop],
                    preferred_element_type=jnp.float32) + b1[:, start:stop]
        a = jnp.maximum(a, 0.0)
        part = jnp.dot(a.astype(cdt), w2_ref[0, start:stop, :],
                       preferred_element_type=jnp.float32)
        ff = part if ff is None else ff + part
    ff = ff + b2

    # ---- residual + LayerNorm 2, store resident activations ----
    out = _layernorm(h1 + ff, g2, be2)
    o_ref[...] = out.reshape(Bb, S, E).astype(o_ref.dtype)

    # ---- last layer: optional final LayerNorm ----
    if has_final_norm:
        @pl.when(l == pl.num_programs(1) - 1)
        def _():
            y = _layernorm(out, ng_ref[...], nb_ref[...])
            o_ref[...] = y.reshape(Bb, S, E).astype(o_ref.dtype)


# -------------------------------- wrapper -------------------------------------


def transformer_encoder(src_sbe, params, *, nhead, block_b=None, ff_chunk=None,
                        vmem_limit_bytes=None):
    """src_sbe: (S, B, E) like PyTorch's default layout. Returns (S, B, E)."""
    x = jnp.transpose(src_sbe, (1, 0, 2))                 # (B, S, E) batch-major
    B, S, E = x.shape
    L = params["wqkv"].shape[0]
    dff = params["w1"].shape[-1]
    hd = E // nhead

    if block_b is None:
        block_b = B
    assert B % block_b == 0, "block_b must divide the batch size"
    if ff_chunk is None:
        ff_chunk = dff if dff <= 2048 else 512
    if vmem_limit_bytes is None:
        vmem_limit_bytes = _default_vmem_limit_bytes()

    has_norm = params.get("norm_g") is not None
    ng = params["norm_g"] if has_norm else jnp.ones((1, E), jnp.float32)
    nb = params["norm_b"] if has_norm else jnp.zeros((1, E), jnp.float32)

    def layer_spec(a):
        nd = a.ndim
        return pl.BlockSpec((1,) + a.shape[1:],
                            lambda bb, l, _n=nd: (l,) + (0,) * (_n - 1))

    weights = [params["wqkv"], params["wo"], params["w1"], params["w2"],
               params["vec"]]

    kernel = functools.partial(
        encoder_stack_kernel, nhead=nhead, head_dim=hd, dff=dff,
        ff_chunk=ff_chunk, has_final_norm=has_norm)

    out = pl.pallas_call(
        kernel,
        out_shape=jax.ShapeDtypeStruct((B, S, E), x.dtype),
        grid=(B // block_b, L),                           # (batch blocks, layers)
        in_specs=[pl.BlockSpec((block_b, S, E), lambda bb, l: (bb, 0, 0))]
        + [layer_spec(a) for a in weights]
        + [pl.BlockSpec((1, E), lambda bb, l: (0, 0)),
           pl.BlockSpec((1, E), lambda bb, l: (0, 0))],
        out_specs=pl.BlockSpec((block_b, S, E), lambda bb, l: (bb, 0, 0)),
        scratch_shapes=[pltpu.VMEM((block_b * S, E), jnp.float32)],
        compiler_params=pltpu.CompilerParams(
            dimension_semantics=("parallel", "arbitrary"),
            vmem_limit_bytes=int(vmem_limit_bytes),
        ),
    )(x, *weights, ng, nb)
    return jnp.transpose(out, (1, 0, 2))                  # back to (S, B, E)


# ------------------------- parameter construction -----------------------------


def init_layer_params(key, E, nhead, dff, dtype=jnp.float32):
    """PyTorch-layout parameters of one nn.TransformerEncoderLayer."""
    ks = jax.random.split(key, 8)

    def uni(k, shape, fan_in):
        bound = 1.0 / math.sqrt(fan_in)
        return jax.random.uniform(k, shape, dtype, -bound, bound)

    return dict(
        in_proj_w=uni(ks[0], (3 * E, E), E),   # [Wq; Wk; Wv]
        in_proj_b=uni(ks[1], (3 * E,), E),
        out_proj_w=uni(ks[2], (E, E), E),
        out_proj_b=uni(ks[3], (E,), E),
        lin1_w=uni(ks[4], (dff, E), E),
        lin1_b=uni(ks[5], (dff,), E),
        lin2_w=uni(ks[6], (E, dff), dff),
        lin2_b=uni(ks[7], (E,), dff),
        ln1_g=jnp.ones((E,), dtype), ln1_b=jnp.zeros((E,), dtype),
        ln2_g=jnp.ones((E,), dtype), ln2_b=jnp.zeros((E,), dtype),
    )


def pack_params(layer_params, nhead, norm_g=None, norm_b=None,
                weight_dtype=jnp.bfloat16):
    """Pre-transpose, fold the Q scale, cast matmul weights to bf16, stack along
    a leading layer axis, and pack all per-layer vectors into one f32 slab."""
    E = layer_params[0]["out_proj_w"].shape[0]
    dff = layer_params[0]["lin1_w"].shape[0]
    hd = E // nhead
    scale = 1.0 / math.sqrt(hd)
    dmax = max(3 * E, dff)

    def pad_row(v):
        v = jnp.asarray(v, jnp.float32)
        return jnp.pad(v, (0, dmax - v.shape[0]))

    wqkv_l, wo_l, w1_l, w2_l, vec_l = [], [], [], [], []
    for p in layer_params:
        wqkv = p["in_proj_w"].T.astype(jnp.float32)        # (E, 3E)
        wqkv = wqkv.at[:, :E].multiply(scale)              # fold 1/sqrt(hd) into Q
        bqkv = p["in_proj_b"].astype(jnp.float32)
        bqkv = bqkv.at[:E].multiply(scale)
        wqkv_l.append(wqkv.astype(weight_dtype))
        wo_l.append(p["out_proj_w"].T.astype(weight_dtype))        # (E, E)
        w1_l.append(p["lin1_w"].T.astype(weight_dtype))            # (E, dff)
        w2_l.append(p["lin2_w"].T.astype(weight_dtype))            # (dff, E)
        vec_l.append(jnp.stack([
            pad_row(bqkv), pad_row(p["out_proj_b"]), pad_row(p["lin1_b"]),
            pad_row(p["lin2_b"]), pad_row(p["ln1_g"]), pad_row(p["ln1_b"]),
            pad_row(p["ln2_g"]), pad_row(p["ln2_b"])], axis=0))    # (8, dmax)

    return dict(
        wqkv=jnp.stack(wqkv_l), wo=jnp.stack(wo_l),
        w1=jnp.stack(w1_l), w2=jnp.stack(w2_l),
        vec=jnp.stack(vec_l),
        norm_g=None if norm_g is None else jnp.asarray(norm_g, jnp.float32).reshape(1, E),
        norm_b=None if norm_b is None else jnp.asarray(norm_b, jnp.float32).reshape(1, E),
    )


# ----------------------------- pure-JAX reference ------------------------------


def _ref_layer(x, p, nhead):                       # x: (B, S, E)
    B, S, E = x.shape
    hd = E // nhead
    qkv = x @ p["in_proj_w"].T + p["in_proj_b"]
    q = qkv[..., :E].reshape(B, S, nhead, hd)
    k = qkv[..., E:2 * E].reshape(B, S, nhead, hd)
    v = qkv[..., 2 * E:].reshape(B, S, nhead, hd)
    logits = jnp.einsum("bqhd,bkhd->bhqk", q, k) / math.sqrt(hd)
    attn = jax.nn.softmax(logits, axis=-1)
    ctx = jnp.einsum("bhqk,bkhd->bqhd", attn, v).reshape(B, S, E)
    sa = ctx @ p["out_proj_w"].T + p["out_proj_b"]
    h1 = _layernorm(x + sa, p["ln1_g"], p["ln1_b"])
    ff = jnp.maximum(h1 @ p["lin1_w"].T + p["lin1_b"], 0.0) @ p["lin2_w"].T + p["lin2_b"]
    return _layernorm(h1 + ff, p["ln2_g"], p["ln2_b"])


def _ref_encoder(src_sbe, layer_params, nhead, norm_g, norm_b):
    x = jnp.transpose(src_sbe, (1, 0, 2))
    for p in layer_params:
        x = _ref_layer(x, p, nhead)
    if norm_g is not None:
        x = _layernorm(x, norm_g, norm_b)
    return jnp.transpose(x, (1, 0, 2))


# ---------------------------------- main ---------------------------------------


if __name__ == "__main__":
    S, B, E = 8, 2, 32                 # seq, batch, d_model
    NHEAD, DFF, NUM_LAYERS = 4, 64, 2

    root = jax.random.PRNGKey(0)
    k_src, k_params = jax.random.split(root)
    src = jax.random.normal(k_src, (S, B, E), jnp.float32)   # PyTorch (S, B, E) layout

    layer_keys = jax.random.split(k_params, NUM_LAYERS)
    layer_params = [init_layer_params(layer_keys[i], E, NHEAD, DFF)
                    for i in range(NUM_LAYERS)]
    norm_g = jnp.ones((E,), jnp.float32)
    norm_b = jnp.zeros((E,), jnp.float32)

    packed = pack_params(layer_params, NHEAD, norm_g, norm_b)

    out = transformer_encoder(src, packed, nhead=NHEAD, block_b=1)
    out = jax.block_until_ready(out)

    ref = _ref_encoder(src, layer_params, NHEAD, norm_g, norm_b)
    assert out.shape == (S, B, E)
    # Tolerance loosened vs. the f32 reference because matmul operands are bf16
    # (f32 accumulation); elementwise/LayerNorm math stays f32.
    assert jnp.allclose(out, ref, atol=1e-1, rtol=5e-2), "mismatch vs pure-JAX reference"

    print("KERNEL_OK")
</pallas_src>

<mosaic_0001>
module attributes {stable_mosaic.version = 11 : i64} {
  func.func @encoder_stack_kernel(%arg0: i32, %arg1: i32, %arg2: memref<1x8x32xf32, #tpu.memory_space<vmem>>, %arg3: memref<1x32x96xbf16, #tpu.memory_space<vmem>>, %arg4: memref<1x32x32xbf16, #tpu.memory_space<vmem>>, %arg5: memref<1x32x64xbf16, #tpu.memory_space<vmem>>, %arg6: memref<1x64x32xbf16, #tpu.memory_space<vmem>>, %arg7: memref<1x8x96xf32, #tpu.memory_space<vmem>>, %arg8: memref<1x32xf32, #tpu.memory_space<vmem>>, %arg9: memref<1x32xf32, #tpu.memory_space<vmem>>, %arg10: memref<1x8x32xf32, #tpu.memory_space<vmem>>, %arg11: memref<8x32xf32, #tpu.memory_space<vmem>>) attributes {dimension_semantics = [#tpu.dimension_semantics<parallel>, #tpu.dimension_semantics<arbitrary>], iteration_bounds = array<i64: 2, 2>, scalar_prefetch = 0 : i64, scratch_operands = 1 : i64, tpu.core_type = #tpu.core_type<tc>, window_params = [{transform_indices = @transform_0, window_bounds = array<i64: 1, 8, 32>}, {transform_indices = @transform_1, window_bounds = array<i64: 1, 32, 96>}, {transform_indices = @transform_2, window_bounds = array<i64: 1, 32, 32>}, {transform_indices = @transform_3, window_bounds = array<i64: 1, 32, 64>}, {transform_indices = @transform_4, window_bounds = array<i64: 1, 64, 32>}, {transform_indices = @transform_5, window_bounds = array<i64: 1, 8, 96>}, {pipeline_mode = #tpu.pipeline_mode<synchronous>, transform_indices = @transform_6, window_bounds = array<i64: 1, 32>}, {pipeline_mode = #tpu.pipeline_mode<synchronous>, transform_indices = @transform_7, window_bounds = array<i64: 1, 32>}, {transform_indices = @transform_8, window_bounds = array<i64: 1, 8, 32>}]} {
    %c0_i32 = arith.constant 0 : i32
    %0 = arith.cmpi eq, %arg1, %c0_i32 : i32
    %1 = arith.extui %0 : i1 to i32
    %c0_i32_0 = arith.constant 0 : i32
    %2 = arith.cmpi ne, %1, %c0_i32_0 : i32
    scf.if %2 {
      %c0_73 = arith.constant 0 : index
      %c0_74 = arith.constant 0 : index
      %c0_75 = arith.constant 0 : index
      %189 = vector.load %arg2[%c0_73, %c0_74, %c0_75] : memref<1x8x32xf32, #tpu.memory_space<vmem>>, vector<1x8x32xf32>
      %c0_76 = arith.constant 0 : index
      %c0_77 = arith.constant 0 : index
      %c0_78 = arith.constant 0 : index
      %190 = vector.load %arg10[%c0_76, %c0_77, %c0_78] : memref<1x8x32xf32, #tpu.memory_space<vmem>>, vector<1x8x32xf32>
      tpu.vector_store %arg10[%c0_76, %c0_77, %c0_78], %189 {strides = array<i32>} : memref<1x8x32xf32, #tpu.memory_space<vmem>>, vector<1x8x32xf32>,
    } else {
    }
    %c0 = arith.constant 0 : index
    %c0_1 = arith.constant 0 : index
    %c0_2 = arith.constant 0 : index
    %3 = vector.load %arg10[%c0, %c0_1, %c0_2] : memref<1x8x32xf32, #tpu.memory_space<vmem>>, vector<1x8x32xf32>
    %4 = vector.shape_cast %3 : vector<1x8x32xf32> to vector<8x32xf32>
    %c0_3 = arith.constant 0 : index
    %c0_4 = arith.constant 0 : index
    %c0_5 = arith.constant 0 : index
    %5 = vector.load %arg7[%c0_3, %c0_4, %c0_5] : memref<1x8x96xf32, #tpu.memory_space<vmem>>, vector<1x1x96xf32>
    %6 = vector.shape_cast %5 : vector<1x1x96xf32> to vector<1x96xf32>
    %c0_6 = arith.constant 0 : index
    %c1 = arith.constant 1 : index
    %c0_7 = arith.constant 0 : index
    %7 = vector.load %arg7[%c0_6, %c1, %c0_7] : memref<1x8x96xf32, #tpu.memory_space<vmem>>, vector<1x1x32xf32>
    %8 = vector.shape_cast %7 : vector<1x1x32xf32> to vector<1x32xf32>
    %c0_8 = arith.constant 0 : index
    %c2 = arith.constant 2 : index
    %c0_9 = arith.constant 0 : index
    %9 = vector.load %arg7[%c0_8, %c2, %c0_9] : memref<1x8x96xf32, #tpu.memory_space<vmem>>, vector<1x1x64xf32>
    %10 = vector.shape_cast %9 : vector<1x1x64xf32> to vector<1x64xf32>
    %c0_10 = arith.constant 0 : index
    %c3 = arith.constant 3 : index
    %c0_11 = arith.constant 0 : index
    %11 = vector.load %arg7[%c0_10, %c3, %c0_11] : memref<1x8x96xf32, #tpu.memory_space<vmem>>, vector<1x1x32xf32>
    %12 = vector.shape_cast %11 : vector<1x1x32xf32> to vector<1x32xf32>
    %c0_12 = arith.constant 0 : index
    %c4 = arith.constant 4 : index
    %c0_13 = arith.constant 0 : index
    %13 = vector.load %arg7[%c0_12, %c4, %c0_13] : memref<1x8x96xf32, #tpu.memory_space<vmem>>, vector<1x1x32xf32>
    %14 = vector.shape_cast %13 : vector<1x1x32xf32> to vector<1x32xf32>
    %c0_14 = arith.constant 0 : index
    %c5 = arith.constant 5 : index
    %c0_15 = arith.constant 0 : index
    %15 = vector.load %arg7[%c0_14, %c5, %c0_15] : memref<1x8x96xf32, #tpu.memory_space<vmem>>, vector<1x1x32xf32>
    %16 = vector.shape_cast %15 : vector<1x1x32xf32> to vector<1x32xf32>
    %c0_16 = arith.constant 0 : index
    %c6 = arith.constant 6 : index
    %c0_17 = arith.constant 0 : index
    %17 = vector.load %arg7[%c0_16, %c6, %c0_17] : memref<1x8x96xf32, #tpu.memory_space<vmem>>, vector<1x1x32xf32>
    %18 = vector.shape_cast %17 : vector<1x1x32xf32> to vector<1x32xf32>
    %c0_18 = arith.constant 0 : index
    %c7 = arith.constant 7 : index
    %c0_19 = arith.constant 0 : index
    %19 = vector.load %arg7[%c0_18, %c7, %c0_19] : memref<1x8x96xf32, #tpu.memory_space<vmem>>, vector<1x1x32xf32>
    %20 = vector.shape_cast %19 : vector<1x1x32xf32> to vector<1x32xf32>
    %21 = arith.truncf %4 : vector<8x32xf32> to vector<8x32xbf16>
    %c0_20 = arith.constant 0 : index
    %c0_21 = arith.constant 0 : index
    %c0_22 = arith.constant 0 : index
    %22 = vector.load %arg3[%c0_20, %c0_21, %c0_22] : memref<1x32x96xbf16, #tpu.memory_space<vmem>>, vector<1x32x96xbf16>
    %23 = vector.shape_cast %22 : vector<1x32x96xbf16> to vector<32x96xbf16>
    %cst = arith.constant dense<0.000000e+00> : vector<8x96xf32>
    %24 = tpu.matmul %21, %23, %cst {dimension_numbers = #tpu.dot_dimension_numbers<[1], [0], [0], [1], [0, 0, 1, 1], [], []>} : vector<8x32xbf16>, vector<32x96xbf16>, vector<8x96xf32> -> vector<8x96xf32>
    %25 = vector.broadcast %6 : vector<1x96xf32> to vector<8x96xf32>
    %26 = arith.addf %24, %25 : vector<8x96xf32>
    %27 = vector.extract_strided_slice %26 {offsets = [0, 0], sizes = [8, 32], strides = [1, 1]} : vector<8x96xf32> to vector<8x32xf32>
    %28 = vector.shape_cast %27 : vector<8x32xf32> to vector<1x8x32xf32>
    %29 = vector.extract_strided_slice %26 {offsets = [0, 32], sizes = [8, 32], strides = [1, 1]} : vector<8x96xf32> to vector<8x32xf32>
    %30 = vector.shape_cast %29 : vector<8x32xf32> to vector<1x8x32xf32>
    %31 = vector.extract_strided_slice %26 {offsets = [0, 64], sizes = [8, 32], strides = [1, 1]} : vector<8x96xf32> to vector<8x32xf32>
    %32 = vector.shape_cast %31 : vector<8x32xf32> to vector<1x8x32xf32>
    %33 = vector.extract_strided_slice %28 {offsets = [0, 0, 0], sizes = [1, 8, 8], strides = [1, 1, 1]} : vector<1x8x32xf32> to vector<1x8x8xf32>
    %34 = arith.truncf %33 : vector<1x8x8xf32> to vector<1x8x8xbf16>
    %35 = vector.extract_strided_slice %30 {offsets = [0, 0, 0], sizes = [1, 8, 8], strides = [1, 1, 1]} : vector<1x8x32xf32> to vector<1x8x8xf32>
    %36 = arith.truncf %35 : vector<1x8x8xf32> to vector<1x8x8xbf16>
    %37 = vector.extract_strided_slice %32 {offsets = [0, 0, 0], sizes = [1, 8, 8], strides = [1, 1, 1]} : vector<1x8x32xf32> to vector<1x8x8xf32>
    %38 = arith.truncf %37 : vector<1x8x8xf32> to vector<1x8x8xbf16>
    "tpu.trace_start"() <{level = 10 : i32, message = "bqd,bkd->bqk"}> : () -> ()
    %cst_23 = arith.constant dense<0.000000e+00> : vector<1x8x8xf32>
    %39 = tpu.matmul %34, %36, %cst_23 {dimension_numbers = #tpu.dot_dimension_numbers<[2], [2], [1], [1], [0, 0, 0, 1, 1, 1], [0], [0]>} : vector<1x8x8xbf16>, vector<1x8x8xbf16>, vector<1x8x8xf32> -> vector<1x8x8xf32>
    "tpu.trace_stop"() : () -> ()
    %cst_24 = arith.constant dense<0xFF800000> : vector<1x8xf32>
    %40 = vector.multi_reduction <maximumf>, %39, %cst_24 [2] : vector<1x8x8xf32> to vector<1x8xf32>
    %41 = vector.shape_cast %40 : vector<1x8xf32> to vector<1x8x1xf32>
    %42 = vector.broadcast %41 : vector<1x8x1xf32> to vector<1x8x8xf32>
    %43 = arith.subf %39, %42 : vector<1x8x8xf32>
    %44 = math.exp %43 : vector<1x8x8xf32>
    %cst_25 = arith.constant dense<0.000000e+00> : vector<1x8xf32>
    %45 = vector.multi_reduction <add>, %44, %cst_25 [2] : vector<1x8x8xf32> to vector<1x8xf32>
    %46 = vector.shape_cast %45 : vector<1x8xf32> to vector<1x8x1xf32>
    %47 = tpu.reciprocal %46 {approx = true} : vector<1x8x1xf32> -> vector<1x8x1xf32>
    %48 = vector.broadcast %47 : vector<1x8x1xf32> to vector<1x8x8xf32>
    %49 = arith.mulf %44, %48 : vector<1x8x8xf32>
    %50 = arith.truncf %49 : vector<1x8x8xf32> to vector<1x8x8xbf16>
    "tpu.trace_start"() <{level = 10 : i32, message = "bqk,bkd->bqd"}> : () -> ()
    %cst_26 = arith.constant dense<0.000000e+00> : vector<1x8x8xf32>
    %51 = tpu.matmul %50, %38, %cst_26 {dimension_numbers = #tpu.dot_dimension_numbers<[2], [1], [1], [2], [0, 0, 0, 1, 1, 2], [0], [0]>} : vector<1x8x8xbf16>, vector<1x8x8xbf16>, vector<1x8x8xf32> -> vector<1x8x8xf32>
    "tpu.trace_stop"() : () -> ()
    %52 = vector.shape_cast %51 : vector<1x8x8xf32> to vector<8x8xf32>
    %c0_27 = arith.constant 0 : index
    %c0_28 = arith.constant 0 : index
    %53 = vector.load %arg11[%c0_27, %c0_28] : memref<8x32xf32, #tpu.memory_space<vmem>>, vector<8x8xf32>
    tpu.vector_store %arg11[%c0_27, %c0_28], %52 {strides = array<i32>} : memref<8x32xf32, #tpu.memory_space<vmem>>, vector<8x8xf32>,
    %54 = vector.extract_strided_slice %28 {offsets = [0, 0, 8], sizes = [1, 8, 8], strides = [1, 1, 1]} : vector<1x8x32xf32> to vector<1x8x8xf32>
    %55 = arith.truncf %54 : vector<1x8x8xf32> to vector<1x8x8xbf16>
    %56 = vector.extract_strided_slice %30 {offsets = [0, 0, 8], sizes = [1, 8, 8], strides = [1, 1, 1]} : vector<1x8x32xf32> to vector<1x8x8xf32>
    %57 = arith.truncf %56 : vector<1x8x8xf32> to vector<1x8x8xbf16>
    %58 = vector.extract_strided_slice %32 {offsets = [0, 0, 8], sizes = [1, 8, 8], strides = [1, 1, 1]} : vector<1x8x32xf32> to vector<1x8x8xf32>
    %59 = arith.truncf %58 : vector<1x8x8xf32> to vector<1x8x8xbf16>
    "tpu.trace_start"() <{level = 10 : i32, message = "bqd,bkd->bqk"}> : () -> ()
    %cst_29 = arith.constant dense<0.000000e+00> : vector<1x8x8xf32>
    %60 = tpu.matmul %55, %57, %cst_29 {dimension_numbers = #tpu.dot_dimension_numbers<[2], [2], [1], [1], [0, 0, 0, 1, 1, 1], [0], [0]>} : vector<1x8x8xbf16>, vector<1x8x8xbf16>, vector<1x8x8xf32> -> vector<1x8x8xf32>
    "tpu.trace_stop"() : () -> ()
    %cst_30 = arith.constant dense<0xFF800000> : vector<1x8xf32>
    %61 = vector.multi_reduction <maximumf>, %60, %cst_30 [2] : vector<1x8x8xf32> to vector<1x8xf32>
    %62 = vector.shape_cast %61 : vector<1x8xf32> to vector<1x8x1xf32>
    %63 = vector.broadcast %62 : vector<1x8x1xf32> to vector<1x8x8xf32>
    %64 = arith.subf %60, %63 : vector<1x8x8xf32>
    %65 = math.exp %64 : vector<1x8x8xf32>
    %cst_31 = arith.constant dense<0.000000e+00> : vector<1x8xf32>
    %66 = vector.multi_reduction <add>, %65, %cst_31 [2] : vector<1x8x8xf32> to vector<1x8xf32>
    %67 = vector.shape_cast %66 : vector<1x8xf32> to vector<1x8x1xf32>
    %68 = tpu.reciprocal %67 {approx = true} : vector<1x8x1xf32> -> vector<1x8x1xf32>
    %69 = vector.broadcast %68 : vector<1x8x1xf32> to vector<1x8x8xf32>
    %70 = arith.mulf %65, %69 : vector<1x8x8xf32>
    %71 = arith.truncf %70 : vector<1x8x8xf32> to vector<1x8x8xbf16>
    "tpu.trace_start"() <{level = 10 : i32, message = "bqk,bkd->bqd"}> : () -> ()
    %cst_32 = arith.constant dense<0.000000e+00> : vector<1x8x8xf32>
    %72 = tpu.matmul %71, %59, %cst_32 {dimension_numbers = #tpu.dot_dimension_numbers<[2], [1], [1], [2], [0, 0, 0, 1, 1, 2], [0], [0]>} : vector<1x8x8xbf16>, vector<1x8x8xbf16>, vector<1x8x8xf32> -> vector<1x8x8xf32>
    "tpu.trace_stop"() : () -> ()
    %73 = vector.shape_cast %72 : vector<1x8x8xf32> to vector<8x8xf32>
    %c0_33 = arith.constant 0 : index
    %c8 = arith.constant 8 : index
    %74 = vector.load %arg11[%c0_33, %c8] : memref<8x32xf32, #tpu.memory_space<vmem>>, vector<8x8xf32>
    tpu.vector_store %arg11[%c0_33, %c8], %73 {strides = array<i32>} : memref<8x32xf32, #tpu.memory_space<vmem>>, vector<8x8xf32>,
    %75 = vector.extract_strided_slice %28 {offsets = [0, 0, 16], sizes = [1, 8, 8], strides = [1, 1, 1]} : vector<1x8x32xf32> to vector<1x8x8xf32>
    %76 = arith.truncf %75 : vector<1x8x8xf32> to vector<1x8x8xbf16>
    %77 = vector.extract_strided_slice %30 {offsets = [0, 0, 16], sizes = [1, 8, 8], strides = [1, 1, 1]} : vector<1x8x32xf32> to vector<1x8x8xf32>
    %78 = arith.truncf %77 : vector<1x8x8xf32> to vector<1x8x8xbf16>
    %79 = vector.extract_strided_slice %32 {offsets = [0, 0, 16], sizes = [1, 8, 8], strides = [1, 1, 1]} : vector<1x8x32xf32> to vector<1x8x8xf32>
    %80 = arith.truncf %79 : vector<1x8x8xf32> to vector<1x8x8xbf16>
    "tpu.trace_start"() <{level = 10 : i32, message = "bqd,bkd->bqk"}> : () -> ()
    %cst_34 = arith.constant dense<0.000000e+00> : vector<1x8x8xf32>
    %81 = tpu.matmul %76, %78, %cst_34 {dimension_numbers = #tpu.dot_dimension_numbers<[2], [2], [1], [1], [0, 0, 0, 1, 1, 1], [0], [0]>} : vector<1x8x8xbf16>, vector<1x8x8xbf16>, vector<1x8x8xf32> -> vector<1x8x8xf32>
    "tpu.trace_stop"() : () -> ()
    %cst_35 = arith.constant dense<0xFF800000> : vector<1x8xf32>
    %82 = vector.multi_reduction <maximumf>, %81, %cst_35 [2] : vector<1x8x8xf32> to vector<1x8xf32>
    %83 = vector.shape_cast %82 : vector<1x8xf32> to vector<1x8x1xf32>
    %84 = vector.broadcast %83 : vector<1x8x1xf32> to vector<1x8x8xf32>
    %85 = arith.subf %81, %84 : vector<1x8x8xf32>
    %86 = math.exp %85 : vector<1x8x8xf32>
    %cst_36 = arith.constant dense<0.000000e+00> : vector<1x8xf32>
    %87 = vector.multi_reduction <add>, %86, %cst_36 [2] : vector<1x8x8xf32> to vector<1x8xf32>
    %88 = vector.shape_cast %87 : vector<1x8xf32> to vector<1x8x1xf32>
    %89 = tpu.reciprocal %88 {approx = true} : vector<1x8x1xf32> -> vector<1x8x1xf32>
    %90 = vector.broadcast %89 : vector<1x8x1xf32> to vector<1x8x8xf32>
    %91 = arith.mulf %86, %90 : vector<1x8x8xf32>
    %92 = arith.truncf %91 : vector<1x8x8xf32> to vector<1x8x8xbf16>
    "tpu.trace_start"() <{level = 10 : i32, message = "bqk,bkd->bqd"}> : () -> ()
    %cst_37 = arith.constant dense<0.000000e+00> : vector<1x8x8xf32>
    %93 = tpu.matmul %92, %80, %cst_37 {dimension_numbers = #tpu.dot_dimension_numbers<[2], [1], [1], [2], [0, 0, 0, 1, 1, 2], [0], [0]>} : vector<1x8x8xbf16>, vector<1x8x8xbf16>, vector<1x8x8xf32> -> vector<1x8x8xf32>
    "tpu.trace_stop"() : () -> ()
    %94 = vector.shape_cast %93 : vector<1x8x8xf32> to vector<8x8xf32>
    %c0_38 = arith.constant 0 : index
    %c16 = arith.constant 16 : index
    %95 = vector.load %arg11[%c0_38, %c16] : memref<8x32xf32, #tpu.memory_space<vmem>>, vector<8x8xf32>
    tpu.vector_store %arg11[%c0_38, %c16], %94 {strides = array<i32>} : memref<8x32xf32, #tpu.memory_space<vmem>>, vector<8x8xf32>,
    %96 = vector.extract_strided_slice %28 {offsets = [0, 0, 24], sizes = [1, 8, 8], strides = [1, 1, 1]} : vector<1x8x32xf32> to vector<1x8x8xf32>
    %97 = arith.truncf %96 : vector<1x8x8xf32> to vector<1x8x8xbf16>
    %98 = vector.extract_strided_slice %30 {offsets = [0, 0, 24], sizes = [1, 8, 8], strides = [1, 1, 1]} : vector<1x8x32xf32> to vector<1x8x8xf32>
    %99 = arith.truncf %98 : vector<1x8x8xf32> to vector<1x8x8xbf16>
    %100 = vector.extract_strided_slice %32 {offsets = [0, 0, 24], sizes = [1, 8, 8], strides = [1, 1, 1]} : vector<1x8x32xf32> to vector<1x8x8xf32>
    %101 = arith.truncf %100 : vector<1x8x8xf32> to vector<1x8x8xbf16>
    "tpu.trace_start"() <{level = 10 : i32, message = "bqd,bkd->bqk"}> : () -> ()
    %cst_39 = arith.constant dense<0.000000e+00> : vector<1x8x8xf32>
    %102 = tpu.matmul %97, %99, %cst_39 {dimension_numbers = #tpu.dot_dimension_numbers<[2], [2], [1], [1], [0, 0, 0, 1, 1, 1], [0], [0]>} : vector<1x8x8xbf16>, vector<1x8x8xbf16>, vector<1x8x8xf32> -> vector<1x8x8xf32>
    "tpu.trace_stop"() : () -> ()
    %cst_40 = arith.constant dense<0xFF800000> : vector<1x8xf32>
    %103 = vector.multi_reduction <maximumf>, %102, %cst_40 [2] : vector<1x8x8xf32> to vector<1x8xf32>
    %104 = vector.shape_cast %103 : vector<1x8xf32> to vector<1x8x1xf32>
    %105 = vector.broadcast %104 : vector<1x8x1xf32> to vector<1x8x8xf32>
    %106 = arith.subf %102, %105 : vector<1x8x8xf32>
    %107 = math.exp %106 : vector<1x8x8xf32>
    %cst_41 = arith.constant dense<0.000000e+00> : vector<1x8xf32>
    %108 = vector.multi_reduction <add>, %107, %cst_41 [2] : vector<1x8x8xf32> to vector<1x8xf32>
    %109 = vector.shape_cast %108 : vector<1x8xf32> to vector<1x8x1xf32>
    %110 = tpu.reciprocal %109 {approx = true} : vector<1x8x1xf32> -> vector<1x8x1xf32>
    %111 = vector.broadcast %110 : vector<1x8x1xf32> to vector<1x8x8xf32>
    %112 = arith.mulf %107, %111 : vector<1x8x8xf32>
    %113 = arith.truncf %112 : vector<1x8x8xf32> to vector<1x8x8xbf16>
    "tpu.trace_start"() <{level = 10 : i32, message = "bqk,bkd->bqd"}> : () -> ()
    %cst_42 = arith.constant dense<0.000000e+00> : vector<1x8x8xf32>
    %114 = tpu.matmul %113, %101, %cst_42 {dimension_numbers = #tpu.dot_dimension_numbers<[2], [1], [1], [2], [0, 0, 0, 1, 1, 2], [0], [0]>} : vector<1x8x8xbf16>, vector<1x8x8xbf16>, vector<1x8x8xf32> -> vector<1x8x8xf32>
    "tpu.trace_stop"() : () -> ()
    %115 = vector.shape_cast %114 : vector<1x8x8xf32> to vector<8x8xf32>
    %c0_43 = arith.constant 0 : index
    %c24 = arith.constant 24 : index
    %116 = vector.load %arg11[%c0_43, %c24] : memref<8x32xf32, #tpu.memory_space<vmem>>, vector<8x8xf32>
    tpu.vector_store %arg11[%c0_43, %c24], %115 {strides = array<i32>} : memref<8x32xf32, #tpu.memory_space<vmem>>, vector<8x8xf32>,
    %c0_44 = arith.constant 0 : index
    %c0_45 = arith.constant 0 : index
    %117 = vector.load %arg11[%c0_44, %c0_45] : memref<8x32xf32, #tpu.memory_space<vmem>>, vector<8x32xf32>
    %118 = arith.truncf %117 : vector<8x32xf32> to vector<8x32xbf16>
    %c0_46 = arith.constant 0 : index
    %c0_47 = arith.constant 0 : index
    %c0_48 = arith.constant 0 : index
    %119 = vector.load %arg4[%c0_46, %c0_47, %c0_48] : memref<1x32x32xbf16, #tpu.memory_space<vmem>>, vector<1x32x32xbf16>
    %120 = vector.shape_cast %119 : vector<1x32x32xbf16> to vector<32x32xbf16>
    %cst_49 = arith.constant dense<0.000000e+00> : vector<8x32xf32>
    %121 = tpu.matmul %118, %120, %cst_49 {dimension_numbers = #tpu.dot_dimension_numbers<[1], [0], [0], [1], [0, 0, 1, 1], [], []>} : vector<8x32xbf16>, vector<32x32xbf16>, vector<8x32xf32> -> vector<8x32xf32>
    %122 = vector.broadcast %8 : vector<1x32xf32> to vector<8x32xf32>
    %123 = arith.addf %121, %122 : vector<8x32xf32>
    %124 = arith.addf %4, %123 : vector<8x32xf32>
    %cst_50 = arith.constant dense<0.000000e+00> : vector<8xf32>
    %125 = vector.multi_reduction <add>, %124, %cst_50 [1] : vector<8x32xf32> to vector<8xf32>
    %126 = vector.shape_cast %125 : vector<8xf32> to vector<8x1xf32>
    %cst_51 = arith.constant 3.200000e+01 : f32
    %127 = vector.broadcast %cst_51 : f32 to vector<8x1xf32>
    %128 = arith.divf %126, %127 : vector<8x1xf32>
    %129 = vector.broadcast %128 : vector<8x1xf32> to vector<8x32xf32>
    %130 = arith.subf %124, %129 : vector<8x32xf32>
    %131 = arith.mulf %130, %130 : vector<8x32xf32>
    %cst_52 = arith.constant dense<0.000000e+00> : vector<8xf32>
    %132 = vector.multi_reduction <add>, %131, %cst_52 [1] : vector<8x32xf32> to vector<8xf32>
    %133 = vector.shape_cast %132 : vector<8xf32> to vector<8x1xf32>
    %cst_53 = arith.constant 3.200000e+01 : f32
    %134 = vector.broadcast %cst_53 : f32 to vector<8x1xf32>
    %135 = arith.divf %133, %134 : vector<8x1xf32>
    %136 = vector.broadcast %128 : vector<8x1xf32> to vector<8x32xf32>
    %137 = arith.subf %124, %136 : vector<8x32xf32>
    %cst_54 = arith.constant 9.99999974E-6 : f32
    %138 = vector.broadcast %cst_54 : f32 to vector<8x1xf32>
    %139 = arith.addf %135, %138 : vector<8x1xf32>
    %140 = math.rsqrt %139 : vector<8x1xf32>
    %141 = vector.broadcast %140 : vector<8x1xf32> to vector<8x32xf32>
    %142 = arith.mulf %137, %141 : vector<8x32xf32>
    %143 = vector.broadcast %14 : vector<1x32xf32> to vector<8x32xf32>
    %144 = arith.mulf %142, %143 : vector<8x32xf32>
    %145 = vector.broadcast %16 : vector<1x32xf32> to vector<8x32xf32>
    %146 = arith.addf %144, %145 : vector<8x32xf32>
    %147 = arith.truncf %146 : vector<8x32xf32> to vector<8x32xbf16>
    %c0_55 = arith.constant 0 : index
    %c0_56 = arith.constant 0 : index
    %c0_57 = arith.constant 0 : index
    %148 = vector.load %arg5[%c0_55, %c0_56, %c0_57] : memref<1x32x64xbf16, #tpu.memory_space<vmem>>, vector<1x32x64xbf16>
    %149 = vector.shape_cast %148 : vector<1x32x64xbf16> to vector<32x64xbf16>
    %cst_58 = arith.constant dense<0.000000e+00> : vector<8x64xf32>
    %150 = tpu.matmul %147, %149, %cst_58 {dimension_numbers = #tpu.dot_dimension_numbers<[1], [0], [0], [1], [0, 0, 1, 1], [], []>} : vector<8x32xbf16>, vector<32x64xbf16>, vector<8x64xf32> -> vector<8x64xf32>
    %151 = vector.broadcast %10 : vector<1x64xf32> to vector<8x64xf32>
    %152 = arith.addf %150, %151 : vector<8x64xf32>
    %cst_59 = arith.constant 0.000000e+00 : f32
    %153 = vector.broadcast %cst_59 : f32 to vector<8x64xf32>
    %154 = arith.maximumf %152, %153 : vector<8x64xf32>
    %155 = arith.truncf %154 : vector<8x64xf32> to vector<8x64xbf16>
    %c0_60 = arith.constant 0 : index
    %c0_61 = arith.constant 0 : index
    %c0_62 = arith.constant 0 : index
    %156 = vector.load %arg6[%c0_60, %c0_61, %c0_62] : memref<1x64x32xbf16, #tpu.memory_space<vmem>>, vector<1x64x32xbf16>
    %157 = vector.shape_cast %156 : vector<1x64x32xbf16> to vector<64x32xbf16>
    %cst_63 = arith.constant dense<0.000000e+00> : vector<8x32xf32>
    %158 = tpu.matmul %155, %157, %cst_63 {dimension_numbers = #tpu.dot_dimension_numbers<[1], [0], [0], [1], [0, 0, 1, 1], [], []>} : vector<8x64xbf16>, vector<64x32xbf16>, vector<8x32xf32> -> vector<8x32xf32>
    %159 = vector.broadcast %12 : vector<1x32xf32> to vector<8x32xf32>
    %160 = arith.addf %158, %159 : vector<8x32xf32>
    %161 = arith.addf %146, %160 : vector<8x32xf32>
    %cst_64 = arith.constant dense<0.000000e+00> : vector<8xf32>
    %162 = vector.multi_reduction <add>, %161, %cst_64 [1] : vector<8x32xf32> to vector<8xf32>
    %163 = vector.shape_cast %162 : vector<8xf32> to vector<8x1xf32>
    %cst_65 = arith.constant 3.200000e+01 : f32
    %164 = vector.broadcast %cst_65 : f32 to vector<8x1xf32>
    %165 = arith.divf %163, %164 : vector<8x1xf32>
    %166 = vector.broadcast %165 : vector<8x1xf32> to vector<8x32xf32>
    %167 = arith.subf %161, %166 : vector<8x32xf32>
    %168 = arith.mulf %167, %167 : vector<8x32xf32>
    %cst_66 = arith.constant dense<0.000000e+00> : vector<8xf32>
    %169 = vector.multi_reduction <add>, %168, %cst_66 [1] : vector<8x32xf32> to vector<8xf32>
    %170 = vector.shape_cast %169 : vector<8xf32> to vector<8x1xf32>
    %cst_67 = arith.constant 3.200000e+01 : f32
    %171 = vector.broadcast %cst_67 : f32 to vector<8x1xf32>
    %172 = arith.divf %170, %171 : vector<8x1xf32>
    %173 = vector.broadcast %165 : vector<8x1xf32> to vector<8x32xf32>
    %174 = arith.subf %161, %173 : vector<8x32xf32>
    %cst_68 = arith.constant 9.99999974E-6 : f32
    %175 = vector.broadcast %cst_68 : f32 to vector<8x1xf32>
    %176 = arith.addf %172, %175 : vector<8x1xf32>
    %177 = math.rsqrt %176 : vector<8x1xf32>
    %178 = vector.broadcast %177 : vector<8x1xf32> to vector<8x32xf32>
    %179 = arith.mulf %174, %178 : vector<8x32xf32>
    %180 = vector.broadcast %18 : vector<1x32xf32> to vector<8x32xf32>
    %181 = arith.mulf %179, %180 : vector<8x32xf32>
    %182 = vector.broadcast %20 : vector<1x32xf32> to vector<8x32xf32>
    %183 = arith.addf %181, %182 : vector<8x32xf32>
    %184 = vector.shape_cast %183 : vector<8x32xf32> to vector<1x8x32xf32>
    %c0_69 = arith.constant 0 : index
    %c0_70 = arith.constant 0 : index
    %c0_71 = arith.constant 0 : index
    %185 = vector.load %arg10[%c0_69, %c0_70, %c0_71] : memref<1x8x32xf32, #tpu.memory_space<vmem>>, vector<1x8x32xf32>
    tpu.vector_store %arg10[%c0_69, %c0_70, %c0_71], %184 {strides = array<i32>} : memref<1x8x32xf32, #tpu.memory_space<vmem>>, vector<1x8x32xf32>,
    %c1_i32 = arith.constant 1 : i32
    %186 = arith.cmpi eq, %arg1, %c1_i32 : i32
    %187 = arith.extui %186 : i1 to i32
    %c0_i32_72 = arith.constant 0 : i32
    %188 = arith.cmpi ne, %187, %c0_i32_72 : i32
    scf.if %188 {
      %c0_73 = arith.constant 0 : index
      %c0_74 = arith.constant 0 : index
      %189 = vector.load %arg8[%c0_73, %c0_74] : memref<1x32xf32, #tpu.memory_space<vmem>>, vector<1x32xf32>
      %c0_75 = arith.constant 0 : index
      %c0_76 = arith.constant 0 : index
      %190 = vector.load %arg9[%c0_75, %c0_76] : memref<1x32xf32, #tpu.memory_space<vmem>>, vector<1x32xf32>
      %cst_77 = arith.constant dense<0.000000e+00> : vector<8xf32>
      %191 = vector.multi_reduction <add>, %183, %cst_77 [1] : vector<8x32xf32> to vector<8xf32>
      %192 = vector.shape_cast %191 : vector<8xf32> to vector<8x1xf32>
      %cst_78 = arith.constant 3.200000e+01 : f32
      %193 = vector.broadcast %cst_78 : f32 to vector<8x1xf32>
      %194 = arith.divf %192, %193 : vector<8x1xf32>
      %195 = vector.broadcast %194 : vector<8x1xf32> to vector<8x32xf32>
      %196 = arith.subf %183, %195 : vector<8x32xf32>
      %197 = arith.mulf %196, %196 : vector<8x32xf32>
      %cst_79 = arith.constant dense<0.000000e+00> : vector<8xf32>
      %198 = vector.multi_reduction <add>, %197, %cst_79 [1] : vector<8x32xf32> to vector<8xf32>
      %199 = vector.shape_cast %198 : vector<8xf32> to vector<8x1xf32>
      %cst_80 = arith.constant 3.200000e+01 : f32
      %200 = vector.broadcast %cst_80 : f32 to vector<8x1xf32>
      %201 = arith.divf %199, %200 : vector<8x1xf32>
      %202 = vector.broadcast %194 : vector<8x1xf32> to vector<8x32xf32>
      %203 = arith.subf %183, %202 : vector<8x32xf32>
      %cst_81 = arith.constant 9.99999974E-6 : f32
      %204 = vector.broadcast %cst_81 : f32 to vector<8x1xf32>
      %205 = arith.addf %201, %204 : vector<8x1xf32>
      %206 = math.rsqrt %205 : vector<8x1xf32>
      %207 = vector.broadcast %206 : vector<8x1xf32> to vector<8x32xf32>
      %208 = arith.mulf %203, %207 : vector<8x32xf32>
      %209 = vector.broadcast %189 : vector<1x32xf32> to vector<8x32xf32>
      %210 = arith.mulf %208, %209 : vector<8x32xf32>
      %211 = vector.broadcast %190 : vector<1x32xf32> to vector<8x32xf32>
      %212 = arith.addf %210, %211 : vector<8x32xf32>
      %213 = vector.shape_cast %212 : vector<8x32xf32> to vector<1x8x32xf32>
      %c0_82 = arith.constant 0 : index
      %c0_83 = arith.constant 0 : index
      %c0_84 = arith.constant 0 : index
      %214 = vector.load %arg10[%c0_82, %c0_83, %c0_84] : memref<1x8x32xf32, #tpu.memory_space<vmem>>, vector<1x8x32xf32>
      tpu.vector_store %arg10[%c0_82, %c0_83, %c0_84], %213 {strides = array<i32>} : memref<1x8x32xf32, #tpu.memory_space<vmem>>, vector<1x8x32xf32>,
    } else {
    }
    return
  }
  func.func @transform_0(%arg0: i32, %arg1: i32) -> (i32, i32, i32) {
    %c0_i32 = arith.constant 0 : i32
    %c0_i32_0 = arith.constant 0 : i32
    %c0_i32_1 = arith.constant 0 : i32
    return %arg0, %c0_i32, %c0_i32_0 : i32, i32, i32
  }
  func.func @transform_1(%arg0: i32, %arg1: i32) -> (i32, i32, i32) {
    %c0_i32 = arith.constant 0 : i32
    %c0_i32_0 = arith.constant 0 : i32
    %c0_i32_1 = arith.constant 0 : i32
    return %arg1, %c0_i32, %c0_i32_0 : i32, i32, i32
  }
  func.func @transform_2(%arg0: i32, %arg1: i32) -> (i32, i32, i32) {
    %c0_i32 = arith.constant 0 : i32
    %c0_i32_0 = arith.constant 0 : i32
    %c0_i32_1 = arith.constant 0 : i32
    return %arg1, %c0_i32, %c0_i32_0 : i32, i32, i32
  }
  func.func @transform_3(%arg0: i32, %arg1: i32) -> (i32, i32, i32) {
    %c0_i32 = arith.constant 0 : i32
    %c0_i32_0 = arith.constant 0 : i32
    %c0_i32_1 = arith.constant 0 : i32
    return %arg1, %c0_i32, %c0_i32_0 : i32, i32, i32
  }
  func.func @transform_4(%arg0: i32, %arg1: i32) -> (i32, i32, i32) {
    %c0_i32 = arith.constant 0 : i32
    %c0_i32_0 = arith.constant 0 : i32
    %c0_i32_1 = arith.constant 0 : i32
    return %arg1, %c0_i32, %c0_i32_0 : i32, i32, i32
  }
  func.func @transform_5(%arg0: i32, %arg1: i32) -> (i32, i32, i32) {
    %c0_i32 = arith.constant 0 : i32
    %c0_i32_0 = arith.constant 0 : i32
    %c0_i32_1 = arith.constant 0 : i32
    return %arg1, %c0_i32, %c0_i32_0 : i32, i32, i32
  }
  func.func @transform_6(%arg0: i32, %arg1: i32) -> (i32, i32) {
    %c0_i32 = arith.constant 0 : i32
    %c0_i32_0 = arith.constant 0 : i32
    %c0_i32_1 = arith.constant 0 : i32
    return %c0_i32, %c0_i32_0 : i32, i32
  }
  func.func @transform_7(%arg0: i32, %arg1: i32) -> (i32, i32) {
    %c0_i32 = arith.constant 0 : i32
    %c0_i32_0 = arith.constant 0 : i32
    %c0_i32_1 = arith.constant 0 : i32
    return %c0_i32, %c0_i32_0 : i32, i32
  }
  func.func @transform_8(%arg0: i32, %arg1: i32) -> (i32, i32, i32) {
    %c0_i32 = arith.constant 0 : i32
    %c0_i32_0 = arith.constant 0 : i32
    %c0_i32_1 = arith.constant 0 : i32
    return %arg0, %c0_i32, %c0_i32_0 : i32, i32, i32
  }
}

</mosaic_0001>

<llo_original>
// kernel: tpu_custom_call.1
$region0: #{tpu_custom_call.1}
  #allocation0 [shape = 'u32[]', space=smem, size = 0x4, offset = 0x4, fixed_abs, tag = 'smem constant byte address 0x4 - core index']
  #allocation1 [shape = 'u32[144,128]{1,0:T(1,128)}', space=vmem, size = 0x12000, scoped, tag = 'internal scratch']
  #allocation2 [shape = 'f32[8,32]{1,0:T(8,128)}', space=vmem, size = 0x1000, scoped, tag = 'scratch operand']
  %s0 = inlined_call_operand.hbm [shape: f32[2,8,32], index: 0, kind: input, shape index: {}]
  %s1 = inlined_call_operand.vmem [shape: bf16[2,32,96], index: 1, kind: input, shape index: {}]
  %s2 = inlined_call_operand.vmem [shape: bf16[2,32,32], index: 2, kind: input, shape index: {}]
  %s3 = inlined_call_operand.vmem [shape: bf16[2,32,64], index: 3, kind: input, shape index: {}]
  %s4 = inlined_call_operand.vmem [shape: bf16[2,64,32], index: 4, kind: input, shape index: {}]
  %s5 = inlined_call_operand.vmem [shape: f32[2,8,96], index: 5, kind: input, shape index: {}]
  %s6 = inlined_call_operand.vmem [shape: f32[1,32], index: 6, kind: input, shape index: {}]
  %s7 = inlined_call_operand.vmem [shape: f32[1,32], index: 7, kind: input, shape index: {}]
  %s8 = inlined_call_operand.hbm [shape: f32[2,8,32], index: 8, kind: output, shape index: {}]
  %s9 = sld [smem:[#allocation0]]
  $region77: #{tpu_custom_call.1} parent=0
    _
  %s11 = ssub.s32 1, %s9
  %s12 = scalar_select 0, %s11, %s9
  $region1: #{tpu_custom_call.1} parent=0
    #allocation3 [shape = 'u8[8192]{0}', space=vmem, size = 0x2000, scoped, tag = 'input window, operand 0']
    #allocation4 [shape = 's32[2]{0}', space=sflag, size = 0x8, scoped, tag = 'scoped memory for tpu_custom_call.1']
    #allocation5 [shape = 's32[2]{0}', space=sflag, size = 0x8, scoped, tag = 'scoped memory for tpu_custom_call.1']
    #allocation6 [shape = 'u8[8192]{0}', space=vmem, size = 0x2000, scoped, tag = 'output window, operand 0']
    %13 = vsyncpa [#allocation4], 0
    %s14 = scalar_lea.sflag [#allocation4], 1
    %15 = vsyncpa %s14, 0
    %16 = vsyncpa [#allocation5], 0
    %s17 = scalar_lea.sflag [#allocation5], 1
    %18 = vsyncpa %s17, 0
    loop: start=0, step=1, limit=6
    $region2: #{tpu_custom_call.1} parent=1 // loop_pre_header
      _
    $region3: #{tpu_custom_call.1} parent=1 // loop_header
      %s20 = sphi 0, %s24
      %p21 = scmp.ge.s32.totalorder %s20, 6
      %s27 = sphi 0, %s39
      %s28 = sphi 0, %s35
      %s29 = sphi 0, %s27
      %s30 = sphi 0, %s28
      %s31 = sphi 0, %s29
      %s32 = sphi 0, %s30
      %s42 = sphi 0, %s44
      %s45 = sphi 0, %s42
      %s46 = sphi 0, %s45
      %s62 = sphi 0, %s46
      %s68 = sphi 0, %s70
      %s71 = sphi 0, %s68
      %s72 = sphi 0, %s71
      %s88 = sphi 0, %s72
      %s94 = sphi 0, %s96
      %s97 = sphi 0, %s94
      %s98 = sphi 0, %s97
      %s114 = sphi 0, %s98
      %s120 = sphi 0, %s122
      %s123 = sphi 0, %s120
      %s124 = sphi 0, %s123
      %s140 = sphi 0, %s124
      %s146 = sphi 0, %s148
      %s149 = sphi 0, %s146
      %s150 = sphi 0, %s149
      %s166 = sphi 0, %s150
      %s172 = sphi 0, %s174
      %s175 = sphi 0, %s172
      %s176 = sphi 0, %s175
      %s192 = sphi 0, %s176
      %s196 = sphi 0, %s196
      %s198 = sphi 0, %s196
      %s199 = sphi 0, %s198
      %s213 = sphi 0, %s199
      %s217 = sphi 0, %s217
      %s219 = sphi 0, %s217
      %s220 = sphi 0, %s219
      %s234 = sphi 0, %s220
      %s240 = sphi 0, %s242
      %s243 = sphi 0, %s240
      %s244 = sphi 0, %s243
      %s260 = sphi 0, %s244
    $region4: #{tpu_custom_call.1} parent=1 // loop_header_branch
      %23 = sbr.rel (%p21) target = $region8
    $region5: #{tpu_custom_call.1} parent=1 // loop_body
      %s25 = ssub.s32 %s20, 1
      %s26 = ssub.s32 %s20, 2
      %s33 = sadd.s32 1, %s28
      %p34 = scmp.ge.s32.totalorder %s33, 2
      %s35 = scalar_select %p34, 0, %s33
      %s36 = sadd.s32 1, %s27
      %s37 = scalar_select %p34, %s36, %s27
      %p38 = scmp.ge.s32.totalorder %s37, 2
      %s39 = scalar_select %p38, 0, %s37
      %s40 = ssub.s32 %s27, %s39
      %p41 = scmp.eq.s32.totalorder %s40, 0
      %s43 = sadd.s32 %s42, 1
      %s44 = scalar_select %p41, %s42, %s43
      %p47 = pneg %p41
      %p48 = scmp.eq.s32.totalorder %s20, 3
      %p49 = por %p47, %p48
      %p50 = scmp.ne.s32.totalorder %s42, %s45
      %p51 = scmp.eq.s32.totalorder %s20, 0
      %p52 = por %p50, %p51
      %p53 = scmp.ne.s32.totalorder %s42, %s45
      %p54 = scmp.eq.s32.totalorder %s25, 3
      %p55 = por %p53, %p54
      %p56 = scmp.ne.s32.totalorder %s45, %s46
      %p57 = scmp.eq.s32.totalorder %s25, 0
      %p58 = por %p56, %p57
      %p59 = scmp.ne.s32.totalorder %s45, %s46
      %p60 = scmp.eq.s32.totalorder %s26, 3
      %p61 = por %p59, %p60
      %p63 = scmp.ne.s32.totalorder %s46, %s62
      %p64 = scmp.eq.s32.totalorder %s26, 0
      %p65 = por %p63, %p64
      %s66 = ssub.s32 %s28, %s35
      %p67 = scmp.eq.s32.totalorder %s66, 0
      %s69 = sadd.s32 %s68, 1
      %s70 = scalar_select %p67, %s68, %s69
      %p73 = pneg %p67
      %p74 = scmp.eq.s32.totalorder %s20, 3
      %p75 = por %p73, %p74
      %p76 = scmp.ne.s32.totalorder %s68, %s71
      %p77 = scmp.eq.s32.totalorder %s20, 0
      %p78 = por %p76, %p77
      %p79 = scmp.ne.s32.totalorder %s68, %s71
      %p80 = scmp.eq.s32.totalorder %s25, 3
      %p81 = por %p79, %p80
      %p82 = scmp.ne.s32.totalorder %s71, %s72
      %p83 = scmp.eq.s32.totalorder %s25, 0
      %p84 = por %p82, %p83
      %p85 = scmp.ne.s32.totalorder %s71, %s72
      %p86 = scmp.eq.s32.totalorder %s26, 3
      %p87 = por %p85, %p86
      %p89 = scmp.ne.s32.totalorder %s72, %s88
      %p90 = scmp.eq.s32.totalorder %s26, 0
      %p91 = por %p89, %p90
      %s92 = ssub.s32 %s28, %s35
      %p93 = scmp.eq.s32.totalorder %s92, 0
      %s95 = sadd.s32 %s94, 1
      %s96 = scalar_select %p93, %s94, %s95
      %p99 = pneg %p93
      %p100 = scmp.eq.s32.totalorder %s20, 3
      %p101 = por %p99, %p100
      %p102 = scmp.ne.s32.totalorder %s94, %s97
      %p103 = scmp.eq.s32.totalorder %s20, 0
      %p104 = por %p102, %p103
      %p105 = scmp.ne.s32.totalorder %s94, %s97
      %p106 = scmp.eq.s32.totalorder %s25, 3
      %p107 = por %p105, %p106
      %p108 = scmp.ne.s32.totalorder %s97, %s98
      %p109 = scmp.eq.s32.totalorder %s25, 0
      %p110 = por %p108, %p109
      %p111 = scmp.ne.s32.totalorder %s97, %s98
      %p112 = scmp.eq.s32.totalorder %s26, 3
      %p113 = por %p111, %p112
      %p115 = scmp.ne.s32.totalorder %s98, %s114
      %p116 = scmp.eq.s32.totalorder %s26, 0
      %p117 = por %p115, %p116
      %s118 = ssub.s32 %s28, %s35
      %p119 = scmp.eq.s32.totalorder %s118, 0
      %s121 = sadd.s32 %s120, 1
      %s122 = scalar_select %p119, %s120, %s121
      %p125 = pneg %p119
      %p126 = scmp.eq.s32.totalorder %s20, 3
      %p127 = por %p125, %p126
      %p128 = scmp.ne.s32.totalorder %s120, %s123
      %p129 = scmp.eq.s32.totalorder %s20, 0
      %p130 = por %p128, %p129
      %p131 = scmp.ne.s32.totalorder %s120, %s123
      %p132 = scmp.eq.s32.totalorder %s25, 3
      %p133 = por %p131, %p132
      %p134 = scmp.ne.s32.totalorder %s123, %s124
      %p135 = scmp.eq.s32.totalorder %s25, 0
      %p136 = por %p134, %p135
      %p137 = scmp.ne.s32.totalorder %s123, %s124
      %p138 = scmp.eq.s32.totalorder %s26, 3
      %p139 = por %p137, %p138
      %p141 = scmp.ne.s32.totalorder %s124, %s140
      %p142 = scmp.eq.s32.totalorder %s26, 0
      %p143 = por %p141, %p142
      %s144 = ssub.s32 %s28, %s35
      %p145 = scmp.eq.s32.totalorder %s144, 0
      %s147 = sadd.s32 %s146, 1
      %s148 = scalar_select %p145, %s146, %s147
      %p151 = pneg %p145
      %p152 = scmp.eq.s32.totalorder %s20, 3
      %p153 = por %p151, %p152
      %p154 = scmp.ne.s32.totalorder %s146, %s149
      %p155 = scmp.eq.s32.totalorder %s20, 0
      %p156 = por %p154, %p155
      %p157 = scmp.ne.s32.totalorder %s146, %s149
      %p158 = scmp.eq.s32.totalorder %s25, 3
      %p159 = por %p157, %p158
      %p160 = scmp.ne.s32.totalorder %s149, %s150
      %p161 = scmp.eq.s32.totalorder %s25, 0
      %p162 = por %p160, %p161
      %p163 = scmp.ne.s32.totalorder %s149, %s150
      %p164 = scmp.eq.s32.totalorder %s26, 3
      %p165 = por %p163, %p164
      %p167 = scmp.ne.s32.totalorder %s150, %s166
      %p168 = scmp.eq.s32.totalorder %s26, 0
      %p169 = por %p167, %p168
      %s170 = ssub.s32 %s28, %s35
      %p171 = scmp.eq.s32.totalorder %s170, 0
      %s173 = sadd.s32 %s172, 1
      %s174 = scalar_select %p171, %s172, %s173
      %p177 = pneg %p171
      %p178 = scmp.eq.s32.totalorder %s20, 3
      %p179 = por %p177, %p178
      %p180 = scmp.ne.s32.totalorder %s172, %s175
      %p181 = scmp.eq.s32.totalorder %s20, 0
      %p182 = por %p180, %p181
      %p183 = scmp.ne.s32.totalorder %s172, %s175
      %p184 = scmp.eq.s32.totalorder %s25, 3
      %p185 = por %p183, %p184
      %p186 = scmp.ne.s32.totalorder %s175, %s176
      %p187 = scmp.eq.s32.totalorder %s25, 0
      %p188 = por %p186, %p187
      %p189 = scmp.ne.s32.totalorder %s175, %s176
      %p190 = scmp.eq.s32.totalorder %s26, 3
      %p191 = por %p189, %p190
      %p193 = scmp.ne.s32.totalorder %s176, %s192
      %p194 = scmp.eq.s32.totalorder %s26, 0
      %p195 = por %p193, %p194
      %s197 = sadd.s32 %s196, 1
      %p200 = scmp.eq.s32.totalorder %s20, 3
      %p201 = scmp.ne.s32.totalorder %s196, %s198
      %p202 = scmp.eq.s32.totalorder %s20, 0
      %p203 = por %p201, %p202
      %p204 = scmp.ne.s32.totalorder %s196, %s198
      %p205 = scmp.eq.s32.totalorder %s25, 3
      %p206 = por %p204, %p205
      %p207 = scmp.ne.s32.totalorder %s198, %s199
      %p208 = scmp.eq.s32.totalorder %s25, 0
      %p209 = por %p207, %p208
      %p210 = scmp.ne.s32.totalorder %s198, %s199
      %p211 = scmp.eq.s32.totalorder %s26, 3
      %p212 = por %p210, %p211
      %p214 = scmp.ne.s32.totalorder %s199, %s213
      %p215 = scmp.eq.s32.totalorder %s26, 0
      %p216 = por %p214, %p215
      %s218 = sadd.s32 %s217, 1
      %p221 = scmp.eq.s32.totalorder %s20, 3
      %p222 = scmp.ne.s32.totalorder %s217, %s219
      %p223 = scmp.eq.s32.totalorder %s20, 0
      %p224 = por %p222, %p223
      %p225 = scmp.ne.s32.totalorder %s217, %s219
      %p226 = scmp.eq.s32.totalorder %s25, 3
      %p227 = por %p225, %p226
      %p228 = scmp.ne.s32.totalorder %s219, %s220
      %p229 = scmp.eq.s32.totalorder %s25, 0
      %p230 = por %p228, %p229
      %p231 = scmp.ne.s32.totalorder %s219, %s220
      %p232 = scmp.eq.s32.totalorder %s26, 3
      %p233 = por %p231, %p232
      %p235 = scmp.ne.s32.totalorder %s220, %s234
      %p236 = scmp.eq.s32.totalorder %s26, 0
      %p237 = por %p235, %p236
      %s238 = ssub.s32 %s27, %s39
      %p239 = scmp.eq.s32.totalorder %s238, 0
      %s241 = sadd.s32 %s240, 1
      %s242 = scalar_select %p239, %s240, %s241
      %p245 = pneg %p239
      %p246 = scmp.eq.s32.totalorder %s20, 3
      %p247 = por %p245, %p246
      %p248 = scmp.ne.s32.totalorder %s240, %s243
      %p249 = scmp.eq.s32.totalorder %s20, 0
      %p250 = por %p248, %p249
      %p251 = scmp.ne.s32.totalorder %s240, %s243
      %p252 = scmp.eq.s32.totalorder %s25, 3
      %p253 = por %p251, %p252
      %p254 = scmp.ne.s32.totalorder %s243, %s244
      %p255 = scmp.eq.s32.totalorder %s25, 0
      %p256 = por %p254, %p255
      %p257 = scmp.ne.s32.totalorder %s243, %s244
      %p258 = scmp.eq.s32.totalorder %s26, 3
      %p259 = por %p257, %p258
      %p261 = scmp.ne.s32.totalorder %s244, %s260
      %p262 = scmp.eq.s32.totalorder %s26, 0
      %p263 = por %p261, %p262
      %p264 = scmp.le.s32.totalorder 1, %s20
      %p265 = scmp.lt.s32.totalorder %s20, 5
      %p266 = pnand %p264, %p265
      %p267 = pneg %p266
      // Predicated region
      $region9: #{tpu_custom_call.1} parent=5 // pred_check
        _
      $region10: #{tpu_custom_call.1} parent=5 // pred_check_branch
        %269 = sbr.rel (%p266) target = $region12
      $region11: #{tpu_custom_call.1} parent=5 // pred_region
        %s270 = ssub.s32 %s20, 1
        // Predicated region
        $region13: #{tpu_custom_call.1} parent=11 // pred_check
          %p271 = pneg %p209
        $region14: #{tpu_custom_call.1} parent=11 // pred_check_branch
          %273 = sbr.rel (%p271) target = $region16
        $region15: #{tpu_custom_call.1} parent=11 // pred_region
          _
        $region16: #{tpu_custom_call.1} parent=11 // pred_fallthru
          _
        // Predicated region
        $region17: #{tpu_custom_call.1} parent=11 // pred_check
          %p274 = pneg %p230
        $region18: #{tpu_custom_call.1} parent=11 // pred_check_branch
          %276 = sbr.rel (%p274) target = $region20
        $region19: #{tpu_custom_call.1} parent=11 // pred_region
          _
        $region20: #{tpu_custom_call.1} parent=11 // pred_fallthru
          _
      $region12: #{tpu_custom_call.1} parent=5 // pred_fallthru
        _
      %p277 = scmp.lt.s32.totalorder %s20, 4
      // Predicated region
      $region21: #{tpu_custom_call.1} parent=5 // pred_check
        %p278 = pneg %p277
      $region22: #{tpu_custom_call.1} parent=5 // pred_check_branch
        %280 = sbr.rel (%p278) target = $region24
      $region23: #{tpu_custom_call.1} parent=5 // pred_region
        // Predicated region
        $region25: #{tpu_custom_call.1} parent=23 // pred_check
          %p281 = pneg %p52
        $region26: #{tpu_custom_call.1} parent=23 // pred_check_branch
          %283 = sbr.rel (%p281) target = $region28
        $region27: #{tpu_custom_call.1} parent=23 // pred_region
          %s284 = sand.u32 %s42, 1
          %s285 = scalar_lea.sflag [#allocation4], %s284
          %s286 = sand.u32 %s42, 1
          %s287 = smul.addr %s286, 8
          %s288 = scalar_lea.vmem [#allocation3], %s287
          %s290 = ssub.s32 128, 128
          %291 = vsyncadd %s285, %s290
          %s292 = smul.addr %s27, 128
          %s293 = scalar_lea.hbm %s0, %s292
          %s295 = sshll.u32 %s288, 4
          %s296 = int_to_ptr.vmem [resolvable:$true] %s295
          %298 = dma.hbm_to_vmem [thread:$0]  %s293, 128, %s296, %s285
        $region28: #{tpu_custom_call.1} parent=23 // pred_fallthru
          _
        // Predicated region
        $region29: #{tpu_custom_call.1} parent=23 // pred_check
          %p299 = pneg %p78
        $region30: #{tpu_custom_call.1} parent=23 // pred_check_branch
          %301 = sbr.rel (%p299) target = $region32
        $region31: #{tpu_custom_call.1} parent=23 // pred_region
          %p302 = scmp.lt.s32.totalorder %s28, 1
          %s303 = scalar_select %p302, %s28, 1
          %s304 = smul.addr %s303, 4
          %s305 = smul.addr %s304, 4
          %s306 = scalar_lea.vmem %s1, %s305
        $region32: #{tpu_custom_call.1} parent=23 // pred_fallthru
          _
        // Predicated region
        $region33: #{tpu_custom_call.1} parent=23 // pred_check
          %p307 = pneg %p104
        $region34: #{tpu_custom_call.1} parent=23 // pred_check_branch
          %309 = sbr.rel (%p307) target = $region36
        $region35: #{tpu_custom_call.1} parent=23 // pred_region
          %p310 = scmp.lt.s32.totalorder %s28, 1
          %s311 = scalar_select %p310, %s28, 1
          %s312 = smul.addr %s311, 4
          %s313 = smul.addr %s312, 4
          %s314 = scalar_lea.vmem %s2, %s313
        $region36: #{tpu_custom_call.1} parent=23 // pred_fallthru
          _
        // Predicated region
        $region37: #{tpu_custom_call.1} parent=23 // pred_check
          %p315 = pneg %p130
        $region38: #{tpu_custom_call.1} parent=23 // pred_check_branch
          %317 = sbr.rel (%p315) target = $region40
        $region39: #{tpu_custom_call.1} parent=23 // pred_region
          %p318 = scmp.lt.s32.totalorder %s28, 1
          %s319 = scalar_select %p318, %s28, 1
          %s320 = smul.addr %s319, 4
          %s321 = smul.addr %s320, 4
          %s322 = scalar_lea.vmem %s3, %s321
        $region40: #{tpu_custom_call.1} parent=23 // pred_fallthru
          _
        // Predicated region
        $region41: #{tpu_custom_call.1} parent=23 // pred_check
          %p323 = pneg %p156
        $region42: #{tpu_custom_call.1} parent=23 // pred_check_branch
          %325 = sbr.rel (%p323) target = $region44
        $region43: #{tpu_custom_call.1} parent=23 // pred_region
          %p326 = scmp.lt.s32.totalorder %s28, 1
          %s327 = scalar_select %p326, %s28, 1
          %s328 = smul.addr %s327, 8
          %s329 = smul.addr %s328, 4
          %s330 = scalar_lea.vmem %s4, %s329
        $region44: #{tpu_custom_call.1} parent=23 // pred_fallthru
          _
        // Predicated region
        $region45: #{tpu_custom_call.1} parent=23 // pred_check
          %p331 = pneg %p182
        $region46: #{tpu_custom_call.1} parent=23 // pred_check_branch
          %333 = sbr.rel (%p331) target = $region48
        $region47: #{tpu_custom_call.1} parent=23 // pred_region
          %p334 = scmp.lt.s32.totalorder %s28, 1
          %s335 = scalar_select %p334, %s28, 1
          %s336 = smul.addr %s335, 8
          %s337 = scalar_lea.vmem %s5, %s336
        $region48: #{tpu_custom_call.1} parent=23 // pred_fallthru
          _
      $region24: #{tpu_custom_call.1} parent=5 // pred_fallthru
        _
      %p338 = scmp.le.s32.totalorder 1, %s20
      %p339 = scmp.lt.s32.totalorder %s20, 5
      %p340 = pnand %p338, %p339
      %p341 = pneg %p340
      // Predicated region
      $region49: #{tpu_custom_call.1} parent=5 // pred_check
        _
      $region50: #{tpu_custom_call.1} parent=5 // pred_check_branch
        %343 = sbr.rel (%p340) target = $region52
      $region51: #{tpu_custom_call.1} parent=5 // pred_region
        %s344 = ssub.s32 %s20, 1
        %s345 = sand.u32 %s45, 1
        %s346 = scalar_lea.sflag [#allocation4], %s345
        %s347 = sand.u32 %s45, 1
        %s348 = smul.addr %s347, 8
        %s349 = scalar_lea.vmem [#allocation3], %s348
        // Predicated region
        $region53: #{tpu_custom_call.1} parent=51 // pred_check
          %p350 = pneg %p58
        $region54: #{tpu_custom_call.1} parent=51 // pred_check_branch
          %352 = sbr.rel (%p350) target = $region56
        $region55: #{tpu_custom_call.1} parent=51 // pred_region
          %353 = dma.done %s346, 128
        $region56: #{tpu_custom_call.1} parent=51 // pred_fallthru
          _
        %s354 = sand.u32 %s45, 1
        %s355 = scalar_lea.sflag [#allocation4], %s354
        %s356 = sand.u32 %s45, 1
        %s357 = smul.addr %s356, 8
        %s358 = scalar_lea.vmem [#allocation3], %s357
        %p359 = pneg %p58
        %p360 = pneg %p55
        %p361 = scmp.lt.s32.totalorder %s30, 1
        %s362 = scalar_select %p361, %s30, 1
        %s363 = smul.addr %s362, 4
        %s364 = smul.addr %s363, 4
        %s365 = scalar_lea.vmem %s1, %s364
        %p366 = pneg %p84
        %p367 = pneg %p81
        %p368 = scmp.lt.s32.totalorder %s30, 1
        %s369 = scalar_select %p368, %s30, 1
        %s370 = smul.addr %s369, 4
        %s371 = smul.addr %s370, 4
        %s372 = scalar_lea.vmem %s2, %s371
        %p373 = pneg %p110
        %p374 = pneg %p107
        %p375 = scmp.lt.s32.totalorder %s30, 1
        %s376 = scalar_select %p375, %s30, 1
        %s377 = smul.addr %s376, 4
        %s378 = smul.addr %s377, 4
        %s379 = scalar_lea.vmem %s3, %s378
        %p380 = pneg %p136
        %p381 = pneg %p133
        %p382 = scmp.lt.s32.totalorder %s30, 1
        %s383 = scalar_select %p382, %s30, 1
        %s384 = smul.addr %s383, 8
        %s385 = smul.addr %s384, 4
        %s386 = scalar_lea.vmem %s4, %s385
        %p387 = pneg %p162
        %p388 = pneg %p159
        %p389 = scmp.lt.s32.totalorder %s30, 1
        %s390 = scalar_select %p389, %s30, 1
        %s391 = smul.addr %s390, 8
        %s392 = scalar_lea.vmem %s5, %s391
        %p393 = pneg %p188
        %p394 = pneg %p185
        %p395 = pneg %p209
        %p396 = pneg %p206
        %p397 = pneg %p230
        %p398 = pneg %p227
        %p399 = pneg %p256
        %p400 = pneg %p253
        %s401 = sand.u32 %s243, 1
        %s402 = scalar_lea.sflag [#allocation5], %s401
        %s403 = sand.u32 %s243, 1
        %s404 = smul.addr %s403, 8
        %s405 = scalar_lea.vmem [#allocation6], %s404
        %p406 = scmp.lt.s32.totalorder %s30, 1
        %s407 = scalar_select %p406, %s30, 1
        %s408 = smul.addr %s407, 4
        %s409 = smul.addr %s408, 4
        %s410 = scalar_lea.vmem %s1, %s409
        %p411 = scmp.lt.s32.totalorder %s30, 1
        %s412 = scalar_select %p411, %s30, 1
        %s413 = smul.addr %s412, 4
        %s414 = smul.addr %s413, 4
        %s415 = scalar_lea.vmem %s2, %s414
        %p416 = scmp.lt.s32.totalorder %s30, 1
        %s417 = scalar_select %p416, %s30, 1
        %s418 = smul.addr %s417, 4
        %s419 = smul.addr %s418, 4
        %s420 = scalar_lea.vmem %s3, %s419
        %p421 = scmp.lt.s32.totalorder %s30, 1
        %s422 = scalar_select %p421, %s30, 1
        %s423 = smul.addr %s422, 8
        %s424 = smul.addr %s423, 4
        %s425 = scalar_lea.vmem %s4, %s424
        %p426 = scmp.lt.s32.totalorder %s30, 1
        %s427 = scalar_select %p426, %s30, 1
        %s428 = smul.addr %s427, 8
        %s429 = scalar_lea.vmem %s5, %s428
        %p431 = scmp.eq.s32.totalorder %s30, 0
        // Predicated region
        $region57: #{tpu_custom_call.1} parent=51 // pred_check
          %p432 = pneg %p431
        $region58: #{tpu_custom_call.1} parent=51 // pred_check_branch
          %434 = sbr.rel (%p432) target = $region60
        $region59: #{tpu_custom_call.1} parent=51 // pred_region
          %v435 = vld [vmem:[%s349] sm:$0xff]
          %vm436 = vcmask 261120
          %437 = vst.msk [vmem:[%s405] sm:$0xff] %vm436, %v435
        $region60: #{tpu_custom_call.1} parent=51 // pred_fallthru
          _
        %v438 = vld [vmem:[%s405] sm:$0xff]
        %v439 = vld [vmem:[%s429] sm:$0x1]
        %v440 = vld [vmem:[%s429 + $0x1] sm:$0x1]
        %v441 = vld [vmem:[%s429 + $0x2] sm:$0x1]
        %v442 = vld [vmem:[%s429 + $0x3] sm:$0x1]
        %v443 = vld [vmem:[%s429 + $0x4] sm:$0x1]
        %v444 = vld [vmem:[%s429 + $0x5] sm:$0x1]
        %v445 = vld [vmem:[%s429 + $0x6] sm:$0x1]
        %v446 = vld [vmem:[%s429 + $0x7] sm:$0x1]
        %v447 = vpack.c.bf16 %v438, %v438
        %v448 = vld [vmem:[%s410] sm:$0xf]
        %v449 = vld [vmem:[%s410 + $0x4] sm:$0xf]
        %v450 = vld [vmem:[%s410 + $0x8] sm:$0xf]
        %v451 = vld [vmem:[%s410 + $0xc] sm:$0xf]
        %v452 = vlaneseq
        %v453 = vshrl.u32 %v452, 7
        %v454 = vsub.s32 0, %v453
        %v455 = vrot.slane %v439, %v454
        %v460 = vunpack.c.l.b16 %v448
        %v461 = vunpack.c.l.b16 %v449
        %v462 = vunpack.c.l.b16 %v450
        %v463 = vunpack.c.l.b16 %v451
        %v464 = vpack.c.b16 %v461, %v460
        %v465 = vpack.c.b16 %v463, %v462
        %vm468 = vcmask 261120
        %v470 = vsel %vm468, %v447, 0
        %472 = vmatprep.subr.bf16.mxu0 0
        %473 = vmatpush1.bf16.msra.mxu0 %v464
        %474 = vmatprep.subr.bf16.mxu0 0
        %475 = vmatpush1.bf16.msra.mxu0 %v465
        %476 = vmatprep.subr.bf16.mxu0 0
        %477 = vmatpush1.bf16.msra.mxu0 0
        %478 = vmatprep.subr.bf16.mxu0 0
        %479 = vmatpush1.bf16.msra.mxu0 0
        %480 = vmatprep.subr.bf16.mxu0 0
        %481 = vmatpush1.bf16.msra.mxu0 0
        %482 = vmatprep.subr.bf16.mxu0 0
        %483 = vmatpush1.bf16.msra.mxu0 0
        %484 = vmatprep.subr.bf16.mxu0 0
        %485 = vmatpush1.bf16.msra.mxu0 0
        %486 = vmatprep.subr.bf16.mxu0 0
        %487 = vmatpush1.bf16.msra.mxu0 0
        %488 = vmatprep.subr.bf16.mxu0 0
        %489 = vmatpush1.bf16.msra.mxu0 0
        %490 = vmatprep.subr.bf16.mxu0 0
        %491 = vmatpush1.bf16.msra.mxu0 0
        %492 = vmatprep.subr.bf16.mxu0 0
        %493 = vmatpush1.bf16.msra.mxu0 0
        %494 = vmatprep.subr.bf16.mxu0 0
        %495 = vmatpush1.bf16.msra.mxu0 0
        %496 = vmatprep.subr.bf16.mxu0 0
        %497 = vmatpush1.bf16.msra.mxu0 0
        %498 = vmatprep.subr.bf16.mxu0 0
        %499 = vmatpush1.bf16.msra.mxu0 0
        %500 = vmatprep.subr.bf16.mxu0 0
        %501 = vmatpush1.bf16.msra.mxu0 0
        %502 = vmatprep.subr.bf16.mxu0 0
        %503 = vmatpush1.bf16.msra.mxu0 0
        %504 = vmatprep.mubr.bf16.mxu0 0
        %505 = vmatmul.mubr.bf16.gmra.mrb[0].mxu0 %v470
        %v506 = vpop.f32.mrb[0].mxu0
        %v507 = vadd.f32 %v455, %v506
        %v508 = vpop.f32.mrb[0].mxu0
        %v509 = vpop.f32.mrb[0].mxu0
        %v510 = vpop.f32.mrb[0].mxu0
        %511 = vdwg.mxu0
        %v512 = vpack.c.bf16 %v507, %v507
        %514 = vrot.lane.b32.xlu0 %v512, 96
        %v515 = vpop.permute.xlu0 %514
        %vm516 = vcmask 64512
        %v518 = vsel %vm516, %v512, 0
        %v521 = vsel %vm516, %v515, 0
        %523 = vmatprep.subr.bf16.mxu0 0
        %524 = vmatpush1.bf16.xpose.msra.mxu0 %v521
        %525 = vmatprep.subr.bf16.mxu0 0
        %526 = vmatpush1.bf16.xpose.msra.mxu0 0
        %527 = vmatprep.subr.bf16.mxu0 0
        %528 = vmatpush1.bf16.xpose.msra.mxu0 0
        %529 = vmatprep.subr.bf16.mxu0 0
        %530 = vmatpush1.bf16.xpose.msra.mxu0 0
        %531 = vmatprep.subr.bf16.mxu0 0
        %532 = vmatpush1.bf16.xpose.msra.mxu0 0
        %533 = vmatprep.subr.bf16.mxu0 0
        %534 = vmatpush1.bf16.xpose.msra.mxu0 0
        %535 = vmatprep.subr.bf16.mxu0 0
        %536 = vmatpush1.bf16.xpose.msra.mxu0 0
        %537 = vmatprep.subr.bf16.mxu0 0
        %538 = vmatpush1.bf16.xpose.msra.mxu0 0
        %539 = vmatprep.subr.bf16.mxu0 0
        %540 = vmatpush1.bf16.xpose.msra.mxu0 0
        %541 = vmatprep.subr.bf16.mxu0 0
        %542 = vmatpush1.bf16.xpose.msra.mxu0 0
        %543 = vmatprep.subr.bf16.mxu0 0
        %544 = vmatpush1.bf16.xpose.msra.mxu0 0
        %545 = vmatprep.subr.bf16.mxu0 0
        %546 = vmatpush1.bf16.xpose.msra.mxu0 0
        %547 = vmatprep.subr.bf16.mxu0 0
        %548 = vmatpush1.bf16.xpose.msra.mxu0 0
        %549 = vmatprep.subr.bf16.mxu0 0
        %550 = vmatpush1.bf16.xpose.msra.mxu0 0
        %551 = vmatprep.subr.bf16.mxu0 0
        %552 = vmatpush1.bf16.xpose.msra.mxu0 0
        %553 = vmatprep.subr.bf16.mxu0 0
        %554 = vmatpush1.bf16.xpose.msra.mxu0 0
        %555 = vmatprep.mubr.bf16.mxu0 0
        %556 = vmatmul.mubr.bf16.gmra.mrb[0].mxu0 %v518
        %v557 = vpop.f32.mrb[0].mxu0
        %v558 = vadd.f32 0.0, %v557
        %v559 = vpop.f32.mrb[0].mxu0
        %v560 = vpop.f32.mrb[0].mxu0
        %v561 = vpop.f32.mrb[0].mxu0
        %562 = vdwg.mxu0
        %v563 = vsel %vm516, %v558, -inf
        %564 = vmax.xlane.f32.xlu0 %v563
        %v565 = vpop.xlane.xlu0 %564
        %v566 = vsub.f32 %v558, %v565
        %v567 = vmul.f32 %v566, 1.442695
        %v568 = vpow.pop %v567
        %v569 = vsel %vm516, %v568, 0.0
        %570 = vadd.xlane.f32.xlu0 %v569
        %v571 = vpop.xlane.xlu0 %570
        %v572 = vrcp.pop %v571
        %v573 = vmul.f32 %v568, %v572
        %v574 = vpack.c.bf16 %v573, %v573
        %575 = vrot.lane.b32.xlu0 %v512, 64
        %v576 = vpop.permute.xlu0 %575
        %v578 = vsel %vm516, %v574, 0
        %vm580 = vcmask 1043456
        %v582 = vsel %vm580, %v576, 0
        %584 = vmatprep.subr.bf16.mxu0 0
        %585 = vmatpush1.bf16.msra.mxu0 %v582
        %586 = vmatprep.subr.bf16.mxu0 0
        %587 = vmatpush1.bf16.msra.mxu0 0
        %588 = vmatprep.subr.bf16.mxu0 0
        %589 = vmatpush1.bf16.msra.mxu0 0
        %590 = vmatprep.subr.bf16.mxu0 0
        %591 = vmatpush1.bf16.msra.mxu0 0
        %592 = vmatprep.subr.bf16.mxu0 0
        %593 = vmatpush1.bf16.msra.mxu0 0
        %594 = vmatprep.subr.bf16.mxu0 0
        %595 = vmatpush1.bf16.msra.mxu0 0
        %596 = vmatprep.subr.bf16.mxu0 0
        %597 = vmatpush1.bf16.msra.mxu0 0
        %598 = vmatprep.subr.bf16.mxu0 0
        %599 = vmatpush1.bf16.msra.mxu0 0
        %600 = vmatprep.subr.bf16.mxu0 0
        %601 = vmatpush1.bf16.msra.mxu0 0
        %602 = vmatprep.subr.bf16.mxu0 0
        %603 = vmatpush1.bf16.msra.mxu0 0
        %604 = vmatprep.subr.bf16.mxu0 0
        %605 = vmatpush1.bf16.msra.mxu0 0
        %606 = vmatprep.subr.bf16.mxu0 0
        %607 = vmatpush1.bf16.msra.mxu0 0
        %608 = vmatprep.subr.bf16.mxu0 0
        %609 = vmatpush1.bf16.msra.mxu0 0
        %610 = vmatprep.subr.bf16.mxu0 0
        %611 = vmatpush1.bf16.msra.mxu0 0
        %612 = vmatprep.subr.bf16.mxu0 0
        %613 = vmatpush1.bf16.msra.mxu0 0
        %614 = vmatprep.subr.bf16.mxu0 0
        %615 = vmatpush1.bf16.msra.mxu0 0
        %616 = vmatprep.mubr.bf16.mxu0 0
        %617 = vmatmul.mubr.bf16.gmra.mrb[0].mxu0 %v578
        %v618 = vpop.f32.mrb[0].mxu0
        %v619 = vadd.f32 0.0, %v618
        %v620 = vpop.f32.mrb[0].mxu0
        %v621 = vpop.f32.mrb[0].mxu0
        %v622 = vpop.f32.mrb[0].mxu0
        %623 = vdwg.mxu0
        %624 = vst.msk [vmem:[#allocation2] sm:$0xff] %vm516, %v619
        %625 = vrot.lane.b32.xlu0 %v512, 120
        %v626 = vpop.permute.xlu0 %625
        %627 = vrot.lane.b32.xlu0 %v512, 88
        %v628 = vpop.permute.xlu0 %627
        %v630 = vsel %vm516, %v626, 0
        %v633 = vsel %vm516, %v628, 0
        %635 = vmatprep.subr.bf16.mxu0 0
        %636 = vmatpush1.bf16.xpose.msra.mxu0 %v633
        %637 = vmatprep.subr.bf16.mxu0 0
        %638 = vmatpush1.bf16.xpose.msra.mxu0 0
        %639 = vmatprep.subr.bf16.mxu0 0
        %640 = vmatpush1.bf16.xpose.msra.mxu0 0
        %641 = vmatprep.subr.bf16.mxu0 0
        %642 = vmatpush1.bf16.xpose.msra.mxu0 0
        %643 = vmatprep.subr.bf16.mxu0 0
        %644 = vmatpush1.bf16.xpose.msra.mxu0 0
        %645 = vmatprep.subr.bf16.mxu0 0
        %646 = vmatpush1.bf16.xpose.msra.mxu0 0
        %647 = vmatprep.subr.bf16.mxu0 0
        %648 = vmatpush1.bf16.xpose.msra.mxu0 0
        %649 = vmatprep.subr.bf16.mxu0 0
        %650 = vmatpush1.bf16.xpose.msra.mxu0 0
        %651 = vmatprep.subr.bf16.mxu0 0
        %652 = vmatpush1.bf16.xpose.msra.mxu0 0
        %653 = vmatprep.subr.bf16.mxu0 0
        %654 = vmatpush1.bf16.xpose.msra.mxu0 0
        %655 = vmatprep.subr.bf16.mxu0 0
        %656 = vmatpush1.bf16.xpose.msra.mxu0 0
        %657 = vmatprep.subr.bf16.mxu0 0
        %658 = vmatpush1.bf16.xpose.msra.mxu0 0
        %659 = vmatprep.subr.bf16.mxu0 0
        %660 = vmatpush1.bf16.xpose.msra.mxu0 0
        %661 = vmatprep.subr.bf16.mxu0 0
        %662 = vmatpush1.bf16.xpose.msra.mxu0 0
        %663 = vmatprep.subr.bf16.mxu0 0
        %664 = vmatpush1.bf16.xpose.msra.mxu0 0
        %665 = vmatprep.subr.bf16.mxu0 0
        %666 = vmatpush1.bf16.xpose.msra.mxu0 0
        %667 = vmatprep.mubr.bf16.mxu0 0
        %668 = vmatmul.mubr.bf16.gmra.mrb[0].mxu0 %v630
        %v669 = vpop.f32.mrb[0].mxu0
        %v670 = vadd.f32 0.0, %v669
        %v671 = vpop.f32.mrb[0].mxu0
        %v672 = vpop.f32.mrb[0].mxu0
        %v673 = vpop.f32.mrb[0].mxu0
        %674 = vdwg.mxu0
        %v675 = vsel %vm516, %v670, -inf
        %676 = vmax.xlane.f32.xlu0 %v675
        %v677 = vpop.xlane.xlu0 %676
        %v678 = vsub.f32 %v670, %v677
        %v679 = vmul.f32 %v678, 1.442695
        %v680 = vpow.pop %v679
        %v681 = vsel %vm516, %v680, 0.0
        %682 = vadd.xlane.f32.xlu0 %v681
        %v683 = vpop.xlane.xlu0 %682
        %v684 = vrcp.pop %v683
        %v685 = vmul.f32 %v680, %v684
        %v686 = vpack.c.bf16 %v685, %v685
        %687 = vrot.lane.b32.xlu0 %v512, 56
        %v688 = vpop.permute.xlu0 %687
        %v690 = vsel %vm516, %v686, 0
        %v693 = vsel %vm580, %v688, 0
        %695 = vmatprep.subr.bf16.mxu0 0
        %696 = vmatpush1.bf16.msra.mxu0 %v693
        %697 = vmatprep.subr.bf16.mxu0 0
        %698 = vmatpush1.bf16.msra.mxu0 0
        %699 = vmatprep.subr.bf16.mxu0 0
        %700 = vmatpush1.bf16.msra.mxu0 0
        %701 = vmatprep.subr.bf16.mxu0 0
        %702 = vmatpush1.bf16.msra.mxu0 0
        %703 = vmatprep.subr.bf16.mxu0 0
        %704 = vmatpush1.bf16.msra.mxu0 0
        %705 = vmatprep.subr.bf16.mxu0 0
        %706 = vmatpush1.bf16.msra.mxu0 0
        %707 = vmatprep.subr.bf16.mxu0 0
        %708 = vmatpush1.bf16.msra.mxu0 0
        %709 = vmatprep.subr.bf16.mxu0 0
        %710 = vmatpush1.bf16.msra.mxu0 0
        %711 = vmatprep.subr.bf16.mxu0 0
        %712 = vmatpush1.bf16.msra.mxu0 0
        %713 = vmatprep.subr.bf16.mxu0 0
        %714 = vmatpush1.bf16.msra.mxu0 0
        %715 = vmatprep.subr.bf16.mxu0 0
        %716 = vmatpush1.bf16.msra.mxu0 0
        %717 = vmatprep.subr.bf16.mxu0 0
        %718 = vmatpush1.bf16.msra.mxu0 0
        %719 = vmatprep.subr.bf16.mxu0 0
        %720 = vmatpush1.bf16.msra.mxu0 0
        %721 = vmatprep.subr.bf16.mxu0 0
        %722 = vmatpush1.bf16.msra.mxu0 0
        %723 = vmatprep.subr.bf16.mxu0 0
        %724 = vmatpush1.bf16.msra.mxu0 0
        %725 = vmatprep.subr.bf16.mxu0 0
        %726 = vmatpush1.bf16.msra.mxu0 0
        %727 = vmatprep.mubr.bf16.mxu0 0
        %728 = vmatmul.mubr.bf16.gmra.mrb[0].mxu0 %v690
        %v729 = vpop.f32.mrb[0].mxu0
        %v730 = vadd.f32 0.0, %v729
        %v731 = vpop.f32.mrb[0].mxu0
        %v732 = vpop.f32.mrb[0].mxu0
        %v733 = vpop.f32.mrb[0].mxu0
        %734 = vdwg.mxu0
        %736 = vrot.lane.b32.xlu0 %v730, 8
        %v737 = vpop.permute.xlu0 %736
        %vm739 = vcmask 130112
        %740 = vst.msk [vmem:[#allocation2] sm:$0xff] %vm739, %v737
        %741 = vrot.lane.b32.xlu0 %v512, 112
        %v742 = vpop.permute.xlu0 %741
        %743 = vrot.lane.b32.xlu0 %v512, 80
        %v744 = vpop.permute.xlu0 %743
        %v746 = vsel %vm516, %v742, 0
        %v749 = vsel %vm516, %v744, 0
        %751 = vmatprep.subr.bf16.mxu0 0
        %752 = vmatpush1.bf16.xpose.msra.mxu0 %v749
        %753 = vmatprep.subr.bf16.mxu0 0
        %754 = vmatpush1.bf16.xpose.msra.mxu0 0
        %755 = vmatprep.subr.bf16.mxu0 0
        %756 = vmatpush1.bf16.xpose.msra.mxu0 0
        %757 = vmatprep.subr.bf16.mxu0 0
        %758 = vmatpush1.bf16.xpose.msra.mxu0 0
        %759 = vmatprep.subr.bf16.mxu0 0
        %760 = vmatpush1.bf16.xpose.msra.mxu0 0
        %761 = vmatprep.subr.bf16.mxu0 0
        %762 = vmatpush1.bf16.xpose.msra.mxu0 0
        %763 = vmatprep.subr.bf16.mxu0 0
        %764 = vmatpush1.bf16.xpose.msra.mxu0 0
        %765 = vmatprep.subr.bf16.mxu0 0
        %766 = vmatpush1.bf16.xpose.msra.mxu0 0
        %767 = vmatprep.subr.bf16.mxu0 0
        %768 = vmatpush1.bf16.xpose.msra.mxu0 0
        %769 = vmatprep.subr.bf16.mxu0 0
        %770 = vmatpush1.bf16.xpose.msra.mxu0 0
        %771 = vmatprep.subr.bf16.mxu0 0
        %772 = vmatpush1.bf16.xpose.msra.mxu0 0
        %773 = vmatprep.subr.bf16.mxu0 0
        %774 = vmatpush1.bf16.xpose.msra.mxu0 0
        %775 = vmatprep.subr.bf16.mxu0 0
        %776 = vmatpush1.bf16.xpose.msra.mxu0 0
        %777 = vmatprep.subr.bf16.mxu0 0
        %778 = vmatpush1.bf16.xpose.msra.mxu0 0
        %779 = vmatprep.subr.bf16.mxu0 0
        %780 = vmatpush1.bf16.xpose.msra.mxu0 0
        %781 = vmatprep.subr.bf16.mxu0 0
        %782 = vmatpush1.bf16.xpose.msra.mxu0 0
        %783 = vmatprep.mubr.bf16.mxu0 0
        %784 = vmatmul.mubr.bf16.gmra.mrb[0].mxu0 %v746
        %v785 = vpop.f32.mrb[0].mxu0
        %v786 = vadd.f32 0.0, %v785
        %v787 = vpop.f32.mrb[0].mxu0
        %v788 = vpop.f32.mrb[0].mxu0
        %v789 = vpop.f32.mrb[0].mxu0
        %790 = vdwg.mxu0
        %v791 = vsel %vm516, %v786, -inf
        %792 = vmax.xlane.f32.xlu0 %v791
        %v793 = vpop.xlane.xlu0 %792
        %v794 = vsub.f32 %v786, %v793
        %v795 = vmul.f32 %v794, 1.442695
        %v796 = vpow.pop %v795
        %v797 = vsel %vm516, %v796, 0.0
        %798 = vadd.xlane.f32.xlu0 %v797
        %v799 = vpop.xlane.xlu0 %798
        %v800 = vrcp.pop %v799
        %v801 = vmul.f32 %v796, %v800
        %v802 = vpack.c.bf16 %v801, %v801
        %803 = vrot.lane.b32.xlu0 %v512, 48
        %v804 = vpop.permute.xlu0 %803
        %v806 = vsel %vm516, %v802, 0
        %v809 = vsel %vm580, %v804, 0
        %811 = vmatprep.subr.bf16.mxu0 0
        %812 = vmatpush1.bf16.msra.mxu0 %v809
        %813 = vmatprep.subr.bf16.mxu0 0
        %814 = vmatpush1.bf16.msra.mxu0 0
        %815 = vmatprep.subr.bf16.mxu0 0
        %816 = vmatpush1.bf16.msra.mxu0 0
        %817 = vmatprep.subr.bf16.mxu0 0
        %818 = vmatpush1.bf16.msra.mxu0 0
        %819 = vmatprep.subr.bf16.mxu0 0
        %820 = vmatpush1.bf16.msra.mxu0 0
        %821 = vmatprep.subr.bf16.mxu0 0
        %822 = vmatpush1.bf16.msra.mxu0 0
        %823 = vmatprep.subr.bf16.mxu0 0
        %824 = vmatpush1.bf16.msra.mxu0 0
        %825 = vmatprep.subr.bf16.mxu0 0
        %826 = vmatpush1.bf16.msra.mxu0 0
        %827 = vmatprep.subr.bf16.mxu0 0
        %828 = vmatpush1.bf16.msra.mxu0 0
        %829 = vmatprep.subr.bf16.mxu0 0
        %830 = vmatpush1.bf16.msra.mxu0 0
        %831 = vmatprep.subr.bf16.mxu0 0
        %832 = vmatpush1.bf16.msra.mxu0 0
        %833 = vmatprep.subr.bf16.mxu0 0
        %834 = vmatpush1.bf16.msra.mxu0 0
        %835 = vmatprep.subr.bf16.mxu0 0
        %836 = vmatpush1.bf16.msra.mxu0 0
        %837 = vmatprep.subr.bf16.mxu0 0
        %838 = vmatpush1.bf16.msra.mxu0 0
        %839 = vmatprep.subr.bf16.mxu0 0
        %840 = vmatpush1.bf16.msra.mxu0 0
        %841 = vmatprep.subr.bf16.mxu0 0
        %842 = vmatpush1.bf16.msra.mxu0 0
        %843 = vmatprep.mubr.bf16.mxu0 0
        %844 = vmatmul.mubr.bf16.gmra.mrb[0].mxu0 %v806
        %v845 = vpop.f32.mrb[0].mxu0
        %v846 = vadd.f32 0.0, %v845
        %v847 = vpop.f32.mrb[0].mxu0
        %v848 = vpop.f32.mrb[0].mxu0
        %v849 = vpop.f32.mrb[0].mxu0
        %850 = vdwg.mxu0
        %852 = vrot.lane.b32.xlu0 %v846, 16
        %v853 = vpop.permute.xlu0 %852
        %vm855 = vcmask 195712
        %856 = vst.msk [vmem:[#allocation2] sm:$0xff] %vm855, %v853
        %857 = vrot.lane.b32.xlu0 %v512, 104
        %v858 = vpop.permute.xlu0 %857
        %859 = vrot.lane.b32.xlu0 %v512, 72
        %v860 = vpop.permute.xlu0 %859
        %v862 = vsel %vm516, %v858, 0
        %v865 = vsel %vm516, %v860, 0
        %867 = vmatprep.subr.bf16.mxu0 0
        %868 = vmatpush1.bf16.xpose.msra.mxu0 %v865
        %869 = vmatprep.subr.bf16.mxu0 0
        %870 = vmatpush1.bf16.xpose.msra.mxu0 0
        %871 = vmatprep.subr.bf16.mxu0 0
        %872 = vmatpush1.bf16.xpose.msra.mxu0 0
        %873 = vmatprep.subr.bf16.mxu0 0
        %874 = vmatpush1.bf16.xpose.msra.mxu0 0
        %875 = vmatprep.subr.bf16.mxu0 0
        %876 = vmatpush1.bf16.xpose.msra.mxu0 0
        %877 = vmatprep.subr.bf16.mxu0 0
        %878 = vmatpush1.bf16.xpose.msra.mxu0 0
        %879 = vmatprep.subr.bf16.mxu0 0
        %880 = vmatpush1.bf16.xpose.msra.mxu0 0
        %881 = vmatprep.subr.bf16.mxu0 0
        %882 = vmatpush1.bf16.xpose.msra.mxu0 0
        %883 = vmatprep.subr.bf16.mxu0 0
        %884 = vmatpush1.bf16.xpose.msra.mxu0 0
        %885 = vmatprep.subr.bf16.mxu0 0
        %886 = vmatpush1.bf16.xpose.msra.mxu0 0
        %887 = vmatprep.subr.bf16.mxu0 0
        %888 = vmatpush1.bf16.xpose.msra.mxu0 0
        %889 = vmatprep.subr.bf16.mxu0 0
        %890 = vmatpush1.bf16.xpose.msra.mxu0 0
        %891 = vmatprep.subr.bf16.mxu0 0
        %892 = vmatpush1.bf16.xpose.msra.mxu0 0
        %893 = vmatprep.subr.bf16.mxu0 0
        %894 = vmatpush1.bf16.xpose.msra.mxu0 0
        %895 = vmatprep.subr.bf16.mxu0 0
        %896 = vmatpush1.bf16.xpose.msra.mxu0 0
        %897 = vmatprep.subr.bf16.mxu0 0
        %898 = vmatpush1.bf16.xpose.msra.mxu0 0
        %899 = vmatprep.mubr.bf16.mxu0 0
        %900 = vmatmul.mubr.bf16.gmra.mrb[0].mxu0 %v862
        %v901 = vpop.f32.mrb[0].mxu0
        %v902 = vadd.f32 0.0, %v901
        %v903 = vpop.f32.mrb[0].mxu0
        %v904 = vpop.f32.mrb[0].mxu0
        %v905 = vpop.f32.mrb[0].mxu0
        %906 = vdwg.mxu0
        %v907 = vsel %vm516, %v902, -inf
        %908 = vmax.xlane.f32.xlu0 %v907
        %v909 = vpop.xlane.xlu0 %908
        %v910 = vsub.f32 %v902, %v909
        %v911 = vmul.f32 %v910, 1.442695
        %v912 = vpow.pop %v911
        %v913 = vsel %vm516, %v912, 0.0
        %914 = vadd.xlane.f32.xlu0 %v913
        %v915 = vpop.xlane.xlu0 %914
        %v916 = vrcp.pop %v915
        %v917 = vmul.f32 %v912, %v916
        %v918 = vpack.c.bf16 %v917, %v917
        %919 = vrot.lane.b32.xlu0 %v512, 40
        %v920 = vpop.permute.xlu0 %919
        %v922 = vsel %vm516, %v918, 0
        %v925 = vsel %vm580, %v920, 0
        %927 = vmatprep.subr.bf16.mxu0 0
        %928 = vmatpush1.bf16.msra.mxu0 %v925
        %929 = vmatprep.subr.bf16.mxu0 0
        %930 = vmatpush1.bf16.msra.mxu0 0
        %931 = vmatprep.subr.bf16.mxu0 0
        %932 = vmatpush1.bf16.msra.mxu0 0
        %933 = vmatprep.subr.bf16.mxu0 0
        %934 = vmatpush1.bf16.msra.mxu0 0
        %935 = vmatprep.subr.bf16.mxu0 0
        %936 = vmatpush1.bf16.msra.mxu0 0
        %937 = vmatprep.subr.bf16.mxu0 0
        %938 = vmatpush1.bf16.msra.mxu0 0
        %939 = vmatprep.subr.bf16.mxu0 0
        %940 = vmatpush1.bf16.msra.mxu0 0
        %941 = vmatprep.subr.bf16.mxu0 0
        %942 = vmatpush1.bf16.msra.mxu0 0
        %943 = vmatprep.subr.bf16.mxu0 0
        %944 = vmatpush1.bf16.msra.mxu0 0
        %945 = vmatprep.subr.bf16.mxu0 0
        %946 = vmatpush1.bf16.msra.mxu0 0
        %947 = vmatprep.subr.bf16.mxu0 0
        %948 = vmatpush1.bf16.msra.mxu0 0
        %949 = vmatprep.subr.bf16.mxu0 0
        %950 = vmatpush1.bf16.msra.mxu0 0
        %951 = vmatprep.subr.bf16.mxu0 0
        %952 = vmatpush1.bf16.msra.mxu0 0
        %953 = vmatprep.subr.bf16.mxu0 0
        %954 = vmatpush1.bf16.msra.mxu0 0
        %955 = vmatprep.subr.bf16.mxu0 0
        %956 = vmatpush1.bf16.msra.mxu0 0
        %957 = vmatprep.subr.bf16.mxu0 0
        %958 = vmatpush1.bf16.msra.mxu0 0
        %959 = vmatprep.mubr.bf16.mxu0 0
        %960 = vmatmul.mubr.bf16.gmra.mrb[0].mxu0 %v922
        %v961 = vpop.f32.mrb[0].mxu0
        %v962 = vadd.f32 0.0, %v961
        %v963 = vpop.f32.mrb[0].mxu0
        %v964 = vpop.f32.mrb[0].mxu0
        %v965 = vpop.f32.mrb[0].mxu0
        %966 = vdwg.mxu0
        %968 = vrot.lane.b32.xlu0 %v962, 24
        %v969 = vpop.permute.xlu0 %968
        %vm971 = vcmask 261312
        %972 = vst.msk [vmem:[#allocation2] sm:$0xff] %vm971, %v969
        %v973 = vld [vmem:[#allocation2] sm:$0xff]
        %v974 = vpack.c.bf16 %v973, %v973
        %v975 = vld [vmem:[%s415] sm:$0xf]
        %v976 = vld [vmem:[%s415 + $0x4] sm:$0xf]
        %v977 = vld [vmem:[%s415 + $0x8] sm:$0xf]
        %v978 = vld [vmem:[%s415 + $0xc] sm:$0xf]
        %v979 = vlaneseq
        %v980 = vshrl.u32 %v979, 7
        %v981 = vsub.s32 0, %v980
        %v982 = vrot.slane %v440, %v981
        %v987 = vunpack.c.l.b16 %v975
        %v988 = vunpack.c.l.b16 %v976
        %v989 = vunpack.c.l.b16 %v977
        %v990 = vunpack.c.l.b16 %v978
        %v991 = vpack.c.b16 %v988, %v987
        %v992 = vpack.c.b16 %v990, %v989
        %v996 = vsel %vm468, %v974, 0
        %998 = vmatprep.subr.bf16.mxu0 0
        %999 = vmatpush1.bf16.msra.mxu0 %v991
        %1000 = vmatprep.subr.bf16.mxu0 0
        %1001 = vmatpush1.bf16.msra.mxu0 %v992
        %1002 = vmatprep.subr.bf16.mxu0 0
        %1003 = vmatpush1.bf16.msra.mxu0 0
        %1004 = vmatprep.subr.bf16.mxu0 0
        %1005 = vmatpush1.bf16.msra.mxu0 0
        %1006 = vmatprep.subr.bf16.mxu0 0
        %1007 = vmatpush1.bf16.msra.mxu0 0
        %1008 = vmatprep.subr.bf16.mxu0 0
        %1009 = vmatpush1.bf16.msra.mxu0 0
        %1010 = vmatprep.subr.bf16.mxu0 0
        %1011 = vmatpush1.bf16.msra.mxu0 0
        %1012 = vmatprep.subr.bf16.mxu0 0
        %1013 = vmatpush1.bf16.msra.mxu0 0
        %1014 = vmatprep.subr.bf16.mxu0 0
        %1015 = vmatpush1.bf16.msra.mxu0 0
        %1016 = vmatprep.subr.bf16.mxu0 0
        %1017 = vmatpush1.bf16.msra.mxu0 0
        %1018 = vmatprep.subr.bf16.mxu0 0
        %1019 = vmatpush1.bf16.msra.mxu0 0
        %1020 = vmatprep.subr.bf16.mxu0 0
        %1021 = vmatpush1.bf16.msra.mxu0 0
        %1022 = vmatprep.subr.bf16.mxu0 0
        %1023 = vmatpush1.bf16.msra.mxu0 0
        %1024 = vmatprep.subr.bf16.mxu0 0
        %1025 = vmatpush1.bf16.msra.mxu0 0
        %1026 = vmatprep.subr.bf16.mxu0 0
        %1027 = vmatpush1.bf16.msra.mxu0 0
        %1028 = vmatprep.subr.bf16.mxu0 0
        %1029 = vmatpush1.bf16.msra.mxu0 0
        %1030 = vmatprep.mubr.bf16.mxu0 0
        %1031 = vmatmul.mubr.bf16.gmra.mrb[0].mxu0 %v996
        %v1032 = vpop.f32.mrb[0].mxu0
        %v1033 = vadd.f32 %v982, %v1032
        %v1034 = vpop.f32.mrb[0].mxu0
        %v1035 = vpop.f32.mrb[0].mxu0
        %v1036 = vpop.f32.mrb[0].mxu0
        %1037 = vdwg.mxu0
        %v1038 = vadd.f32 %v438, %v1033
        %v1039 = vsel %vm468, %v1038, 0.0
        %1040 = vadd.xlane.f32.xlu0 %v1039
        %v1041 = vpop.xlane.xlu0 %1040
        %v1042 = vrcp.pop 32.0
        %v1043 = vmul.f32 %v1041, %v1042
        %v1044 = vsub.f32 %v1038, %v1043
        %v1045 = vmul.f32 %v1044, %v1044
        %v1046 = vsel %vm468, %v1045, 0.0
        %1047 = vadd.xlane.f32.xlu0 %v1046
        %v1048 = vpop.xlane.xlu0 %1047
        %v1049 = vmul.f32 %v1048, %v1042
        %v1050 = vadd.f32 %v1049, 1e-05
        %v1051 = vrsqrt.pop %v1050
        %v1052 = vmul.f32 %v1044, %v1051
        %v1053 = vlaneseq
        %v1054 = vshrl.u32 %v1053, 7
        %v1055 = vsub.s32 0, %v1054
        %v1056 = vrot.slane %v443, %v1055
        %v1057 = vmul.f32 %v1052, %v1056
        %v1058 = vlaneseq
        %v1059 = vshrl.u32 %v1058, 7
        %v1060 = vsub.s32 0, %v1059
        %v1061 = vrot.slane %v444, %v1060
        %v1062 = vadd.f32 %v1057, %v1061
        %v1063 = vpack.c.bf16 %v1062, %v1062
        %v1064 = vld [vmem:[%s420] sm:$0xf]
        %v1065 = vld [vmem:[%s420 + $0x4] sm:$0xf]
        %v1066 = vld [vmem:[%s420 + $0x8] sm:$0xf]
        %v1067 = vld [vmem:[%s420 + $0xc] sm:$0xf]
        %v1068 = vlaneseq
        %v1069 = vshrl.u32 %v1068, 7
        %v1070 = vsub.s32 0, %v1069
        %v1071 = vrot.slane %v441, %v1070
        %v1076 = vunpack.c.l.b16 %v1064
        %v1077 = vunpack.c.l.b16 %v1065
        %v1078 = vunpack.c.l.b16 %v1066
        %v1079 = vunpack.c.l.b16 %v1067
        %v1080 = vpack.c.b16 %v1077, %v1076
        %v1081 = vpack.c.b16 %v1079, %v1078
        %v1085 = vsel %vm468, %v1063, 0
        %1087 = vmatprep.subr.bf16.mxu0 0
        %1088 = vmatpush1.bf16.msra.mxu0 %v1080
        %1089 = vmatprep.subr.bf16.mxu0 0
        %1090 = vmatpush1.bf16.msra.mxu0 %v1081
        %1091 = vmatprep.subr.bf16.mxu0 0
        %1092 = vmatpush1.bf16.msra.mxu0 0
        %1093 = vmatprep.subr.bf16.mxu0 0
        %1094 = vmatpush1.bf16.msra.mxu0 0
        %1095 = vmatprep.subr.bf16.mxu0 0
        %1096 = vmatpush1.bf16.msra.mxu0 0
        %1097 = vmatprep.subr.bf16.mxu0 0
        %1098 = vmatpush1.bf16.msra.mxu0 0
        %1099 = vmatprep.subr.bf16.mxu0 0
        %1100 = vmatpush1.bf16.msra.mxu0 0
        %1101 = vmatprep.subr.bf16.mxu0 0
        %1102 = vmatpush1.bf16.msra.mxu0 0
        %1103 = vmatprep.subr.bf16.mxu0 0
        %1104 = vmatpush1.bf16.msra.mxu0 0
        %1105 = vmatprep.subr.bf16.mxu0 0
        %1106 = vmatpush1.bf16.msra.mxu0 0
        %1107 = vmatprep.subr.bf16.mxu0 0
        %1108 = vmatpush1.bf16.msra.mxu0 0
        %1109 = vmatprep.subr.bf16.mxu0 0
        %1110 = vmatpush1.bf16.msra.mxu0 0
        %1111 = vmatprep.subr.bf16.mxu0 0
        %1112 = vmatpush1.bf16.msra.mxu0 0
        %1113 = vmatprep.subr.bf16.mxu0 0
        %1114 = vmatpush1.bf16.msra.mxu0 0
        %1115 = vmatprep.subr.bf16.mxu0 0
        %1116 = vmatpush1.bf16.msra.mxu0 0
        %1117 = vmatprep.subr.bf16.mxu0 0
        %1118 = vmatpush1.bf16.msra.mxu0 0
        %1119 = vmatprep.mubr.bf16.mxu0 0
        %1120 = vmatmul.mubr.bf16.gmra.mrb[0].mxu0 %v1085
        %v1121 = vpop.f32.mrb[0].mxu0
        %v1122 = vadd.f32 %v1071, %v1121
        %v1123 = vpop.f32.mrb[0].mxu0
        %v1124 = vpop.f32.mrb[0].mxu0
        %v1125 = vpop.f32.mrb[0].mxu0
        %1126 = vdwg.mxu0
        %v1127 = vmax.f32 %v1122, 0.0
        %v1128 = vpack.c.bf16 %v1127, %v1127
        %v1129 = vld [vmem:[%s425] sm:$0xf]
        %v1130 = vld [vmem:[%s425 + $0x4] sm:$0xf]
        %v1131 = vld [vmem:[%s425 + $0x8] sm:$0xf]
        %v1132 = vld [vmem:[%s425 + $0xc] sm:$0xf]
        %v1133 = vld [vmem:[%s425 + $0x10] sm:$0xf]
        %v1134 = vld [vmem:[%s425 + $0x14] sm:$0xf]
        %v1135 = vld [vmem:[%s425 + $0x18] sm:$0xf]
        %v1136 = vld [vmem:[%s425 + $0x1c] sm:$0xf]
        %v1137 = vlaneseq
        %v1138 = vshrl.u32 %v1137, 7
        %v1139 = vsub.s32 0, %v1138
        %v1140 = vrot.slane %v442, %v1139
        %v1149 = vunpack.c.l.b16 %v1129
        %v1150 = vunpack.c.l.b16 %v1130
        %v1151 = vunpack.c.l.b16 %v1131
        %v1152 = vunpack.c.l.b16 %v1132
        %v1153 = vunpack.c.l.b16 %v1133
        %v1154 = vunpack.c.l.b16 %v1134
        %v1155 = vunpack.c.l.b16 %v1135
        %v1156 = vunpack.c.l.b16 %v1136
        %v1157 = vpack.c.b16 %v1150, %v1149
        %v1158 = vpack.c.b16 %v1152, %v1151
        %v1159 = vpack.c.b16 %v1154, %v1153
        %v1160 = vpack.c.b16 %v1156, %v1155
        %vm1165 = vcmask 523264
        %v1167 = vsel %vm1165, %v1128, 0
        %1169 = vmatprep.subr.bf16.mxu0 0
        %1170 = vmatpush1.bf16.msra.mxu0 %v1157
        %1171 = vmatprep.subr.bf16.mxu0 0
        %1172 = vmatpush1.bf16.msra.mxu0 %v1158
        %1173 = vmatprep.subr.bf16.mxu0 0
        %1174 = vmatpush1.bf16.msra.mxu0 %v1159
        %1175 = vmatprep.subr.bf16.mxu0 0
        %1176 = vmatpush1.bf16.msra.mxu0 %v1160
        %1177 = vmatprep.subr.bf16.mxu0 0
        %1178 = vmatpush1.bf16.msra.mxu0 0
        %1179 = vmatprep.subr.bf16.mxu0 0
        %1180 = vmatpush1.bf16.msra.mxu0 0
        %1181 = vmatprep.subr.bf16.mxu0 0
        %1182 = vmatpush1.bf16.msra.mxu0 0
        %1183 = vmatprep.subr.bf16.mxu0 0
        %1184 = vmatpush1.bf16.msra.mxu0 0
        %1185 = vmatprep.subr.bf16.mxu0 0
        %1186 = vmatpush1.bf16.msra.mxu0 0
        %1187 = vmatprep.subr.bf16.mxu0 0
        %1188 = vmatpush1.bf16.msra.mxu0 0
        %1189 = vmatprep.subr.bf16.mxu0 0
        %1190 = vmatpush1.bf16.msra.mxu0 0
        %1191 = vmatprep.subr.bf16.mxu0 0
        %1192 = vmatpush1.bf16.msra.mxu0 0
        %1193 = vmatprep.subr.bf16.mxu0 0
        %1194 = vmatpush1.bf16.msra.mxu0 0
        %1195 = vmatprep.subr.bf16.mxu0 0
        %1196 = vmatpush1.bf16.msra.mxu0 0
        %1197 = vmatprep.subr.bf16.mxu0 0
        %1198 = vmatpush1.bf16.msra.mxu0 0
        %1199 = vmatprep.subr.bf16.mxu0 0
        %1200 = vmatpush1.bf16.msra.mxu0 0
        %1201 = vmatprep.mubr.bf16.mxu0 0
        %1202 = vmatmul.mubr.bf16.gmra.mrb[0].mxu0 %v1167
        %v1203 = vpop.f32.mrb[0].mxu0
        %v1204 = vadd.f32 %v1140, %v1203
        %v1205 = vpop.f32.mrb[0].mxu0
        %v1206 = vpop.f32.mrb[0].mxu0
        %v1207 = vpop.f32.mrb[0].mxu0
        %1208 = vdwg.mxu0
        %v1209 = vadd.f32 %v1062, %v1204
        %v1210 = vsel %vm468, %v1209, 0.0
        %1211 = vadd.xlane.f32.xlu0 %v1210
        %v1212 = vpop.xlane.xlu0 %1211
        %v1213 = vmul.f32 %v1212, %v1042
        %v1214 = vsub.f32 %v1209, %v1213
        %v1215 = vmul.f32 %v1214, %v1214
        %v1216 = vsel %vm468, %v1215, 0.0
        %1217 = vadd.xlane.f32.xlu0 %v1216
        %v1218 = vpop.xlane.xlu0 %1217
        %v1219 = vmul.f32 %v1218, %v1042
        %v1220 = vadd.f32 %v1219, 1e-05
        %v1221 = vrsqrt.pop %v1220
        %v1222 = vmul.f32 %v1214, %v1221
        %v1223 = vlaneseq
        %v1224 = vshrl.u32 %v1223, 7
        %v1225 = vsub.s32 0, %v1224
        %v1226 = vrot.slane %v445, %v1225
        %v1227 = vmul.f32 %v1222, %v1226
        %v1228 = vlaneseq
        %v1229 = vshrl.u32 %v1228, 7
        %v1230 = vsub.s32 0, %v1229
        %v1231 = vrot.slane %v446, %v1230
        %v1232 = vadd.f32 %v1227, %v1231
        %1233 = vst.msk [vmem:[%s405] sm:$0xff] %vm468, %v1232
        %p1234 = scmp.eq.s32.totalorder %s30, 1
        // Predicated region
        $region61: #{tpu_custom_call.1} parent=51 // pred_check
          %p1235 = pneg %p1234
        $region62: #{tpu_custom_call.1} parent=51 // pred_check_branch
          %1237 = sbr.rel (%p1235) target = $region64
        $region63: #{tpu_custom_call.1} parent=51 // pred_region
          %v1238 = vld [vmem:[%s6] sm:$0x1]
          %v1239 = vld [vmem:[%s7] sm:$0x1]
          %v1240 = vsel %vm468, %v1232, 0.0
          %1241 = vadd.xlane.f32.xlu0 %v1240
          %v1242 = vpop.xlane.xlu0 %1241
          %v1243 = vmul.f32 %v1242, %v1042
          %v1244 = vsub.f32 %v1232, %v1243
          %v1245 = vmul.f32 %v1244, %v1244
          %v1246 = vsel %vm468, %v1245, 0.0
          %1247 = vadd.xlane.f32.xlu0 %v1246
          %v1248 = vpop.xlane.xlu0 %1247
          %v1249 = vmul.f32 %v1248, %v1042
          %v1250 = vadd.f32 %v1249, 1e-05
          %v1251 = vrsqrt.pop %v1250
          %v1252 = vmul.f32 %v1244, %v1251
          %v1254 = vlaneseq
          %v1255 = vshrl.u32 %v1254, 7
          %v1256 = vsub.s32 0, %v1255
          %v1257 = vrot.slane %v1238, %v1256
          %v1259 = vmul.f32 %v1252, %v1257
          %v1261 = vlaneseq
          %v1262 = vshrl.u32 %v1261, 7
          %v1263 = vsub.s32 0, %v1262
          %v1264 = vrot.slane %v1239, %v1263
          %v1266 = vadd.f32 %v1259, %v1264
          %1267 = vst.msk [vmem:[%s405] sm:$0xff] %vm468, %v1266
        $region64: #{tpu_custom_call.1} parent=51 // pred_fallthru
          _
        %s1268 = sand.u32 %s243, 1
        %s1269 = scalar_lea.sflag [#allocation5], %s1268
        %s1270 = sand.u32 %s243, 1
        %s1271 = smul.addr %s1270, 8
        %s1272 = scalar_lea.vmem [#allocation6], %s1271
        // Predicated region
        $region65: #{tpu_custom_call.1} parent=51 // pred_check
          %p1273 = pneg %p253
        $region66: #{tpu_custom_call.1} parent=51 // pred_check_branch
          %1275 = sbr.rel (%p1273) target = $region68
        $region67: #{tpu_custom_call.1} parent=51 // pred_region
          %s1277 = ssub.s32 128, 128
          %1278 = vsyncadd %s1269, %s1277
          %s1279 = smul.addr %s29, 128
          %s1280 = scalar_lea.hbm %s8, %s1279
          %s1282 = sshll.u32 %s1272, 4
          %s1283 = int_to_ptr.vmem [resolvable:$true] %s1282
          %1285 = dma.vmem_to_hbm [thread:$0]  %s1283, 128, %s1280, %s1269
        $region68: #{tpu_custom_call.1} parent=51 // pred_fallthru
          _
      $region52: #{tpu_custom_call.1} parent=5 // pred_fallthru
        _
      %p1286 = scmp.le.s32.totalorder 2, %s20
      // Predicated region
      $region69: #{tpu_custom_call.1} parent=5 // pred_check
        %p1287 = pneg %p1286
      $region70: #{tpu_custom_call.1} parent=5 // pred_check_branch
        %1289 = sbr.rel (%p1287) target = $region72
      $region71: #{tpu_custom_call.1} parent=5 // pred_region
        %s1290 = ssub.s32 %s20, 2
        // Predicated region
        $region73: #{tpu_custom_call.1} parent=71 // pred_check
          %p1291 = pneg %p259
        $region74: #{tpu_custom_call.1} parent=71 // pred_check_branch
          %1293 = sbr.rel (%p1291) target = $region76
        $region75: #{tpu_custom_call.1} parent=71 // pred_region
          %s1294 = sand.u32 %s244, 1
          %s1295 = scalar_lea.sflag [#allocation5], %s1294
          %s1296 = sand.u32 %s244, 1
          %s1297 = smul.addr %s1296, 8
          %s1298 = scalar_lea.vmem [#allocation6], %s1297
          %1299 = dma.done %s1295, 128
        $region76: #{tpu_custom_call.1} parent=71 // pred_fallthru
          _
      $region72: #{tpu_custom_call.1} parent=5 // pred_fallthru
        _
    $region6: #{tpu_custom_call.1} parent=1 // loop_footer
      %s24 = sadd.s32 1, %s20
    $region7: #{tpu_custom_call.1} parent=1 // loop_footer_branch
      %19 = sbr.rel target = $region3
    $region8: #{tpu_custom_call.1} parent=1 // loop_exit
      _
    %1300 = vsyncpa [#allocation4], 1
    %s1301 = scalar_lea.sflag [#allocation4], 1
    %1302 = vsyncpa %s1301, 1
    %1303 = vsyncpa [#allocation5], 1
    %s1304 = scalar_lea.sflag [#allocation5], 1
    %1305 = vsyncpa %s1304, 1

</llo_original>
